<compile_context>
chip_gen: v7x
topology: tpu7x:2x2x1
jax: 0.10.0
libtpu: 0.0.40
codegen_flags: <defaults>
</compile_context>

<pallas_src>
import functools

import jax
import jax.numpy as jnp
from jax.experimental import pallas as pl
from jax.experimental.pallas import tpu as pltpu

B = 4       # independent graphs (parallel grid axis)
N = 16      # nodes per graph
D = 32      # dim_in == dim_out (logical feature width)
H = 64      # dim_inner (logical hidden width)
E = 2       # number of edge types
DP = 128    # lane-padded feature width (holds both D and H)
EPS = 1e-5  # PyTorch LayerNorm default eps


# ---------------------------------------------------------------------------
# Fused encoder kernel: (MLPGNN -> LN -> Linear+ReLU -> MLPGNN -> LN) per graph
# ---------------------------------------------------------------------------
def _encoder_kernel(x_ref, an_ref, mk_ref,
                    w11_ref, w12_ref, w21_ref, w22_ref,
                    g1_ref, b1_ref, wi_ref, bi_ref, g2_ref, b2_ref,
                    out_ref, *, n_etypes, d_real):
    f32 = jnp.float32
    inv_d = 1.0 / d_real
    # Lane mask: 1.0 on the d_real real feature lanes, 0.0 on padding lanes (hoisted once).
    lane = jax.lax.broadcasted_iota(jnp.int32, (1, DP), 1)
    lmask = (lane < d_real).astype(f32)

    x = x_ref[0]          # (N, DP)  node features, padding lanes are exact zeros
    a_all = an_ref[0]     # (E, N, N) mean-normalized adjacency (rows sum to 1 or 0)
    mk_all = mk_ref[0]    # (E, N, 1) "has at least one incoming edge of this etype" mask

    def mlp_gnn(x, w1_ref, w2_ref):
        # DGL update_all per edge type, sequentially (later etypes see earlier updates).
        for e in range(n_etypes):                                       # static unroll, E == 2
            h = jnp.maximum(jnp.dot(x, w1_ref[e], preferred_element_type=f32), 0.0)
            m = jnp.dot(h, w2_ref[e], preferred_element_type=f32)       # per-src messages
            agg = jnp.dot(a_all[e], m, preferred_element_type=f32)      # mean over in-edges
            x = jnp.where(mk_all[e] > 0.0, agg, x)   # isolated dst nodes keep previous data
        return x

    def layer_norm(x, g, b):
        # Padding lanes of x are exact zeros, so sum * (1/d_real) is the true mean.
        mu = jnp.sum(x, axis=-1, keepdims=True) * inv_d
        diff = (x - mu) * lmask                       # zero padding lanes before the variance
        var = jnp.sum(diff * diff, axis=-1, keepdims=True) * inv_d
        return diff * jax.lax.rsqrt(var + EPS) * g + b    # g, b zero-padded -> pads stay 0

    x = mlp_gnn(x, w11_ref, w12_ref)                                    # mlp_gnn1
    x = layer_norm(x, g1_ref[...], b1_ref[...])                         # LayerNorm 1
    x = jnp.maximum(
        jnp.dot(x, wi_ref[...], preferred_element_type=f32) + bi_ref[...],
        0.0)                                                            # Linear+ReLU (+Dropout=id)
    x = mlp_gnn(x, w21_ref, w22_ref)                                    # mlp_gnn2
    x = layer_norm(x, g2_ref[...], b2_ref[...])                         # LayerNorm 2
    out_ref[0] = x


# ---------------------------------------------------------------------------
# Wrapper: padding, degree normalization, BlockSpecs
# ---------------------------------------------------------------------------
def _pad_lanes(v):
    """Zero-pad the last (lane) axis to DP."""
    out = jnp.zeros(v.shape[:-1] + (DP,), jnp.float32)
    return out.at[..., : v.shape[-1]].set(v)


def _pad_mat(w):
    """Zero-pad the last two axes of a (..., r, c) weight to (..., DP, DP)."""
    out = jnp.zeros(w.shape[:-2] + (DP, DP), jnp.float32)
    return out.at[..., : w.shape[-2], : w.shape[-1]].set(w)


def _bcast_spec(shape):
    nd = len(shape)
    return pl.BlockSpec(shape, lambda b: (0,) * nd)


def gnn_encoder_forward(x, adj, params):
    """x: (B, N, D) node features; adj: (B, E, N, N), adj[b,e,d,s]=1 iff edge s->d of etype e."""
    b_, n_, _ = x.shape
    e_ = adj.shape[1]

    # Precompute the per-etype mean normalization + deg>0 mask once; both GNN stages share
    # the same adjacency, so no in-kernel reduce / divide is needed.
    deg = jnp.sum(adj, axis=-1, keepdims=True)                   # (B, E, N, 1) in-degree
    a_norm = (adj / jnp.maximum(deg, 1.0)).astype(jnp.float32)   # rows sum to 1 (or 0)
    mask = (deg > 0.0).astype(jnp.float32)                       # (B, E, N, 1)

    # Lane-pad activations and weights to DP = 128 (pads stay exact zeros end-to-end).
    xp = _pad_lanes(x)
    w11, w12 = _pad_mat(params["gnn1_w1"]), _pad_mat(params["gnn1_w2"])
    w21, w22 = _pad_mat(params["gnn2_w1"]), _pad_mat(params["gnn2_w2"])
    wi = _pad_mat(params["inner_w"])
    g1, b1 = _pad_lanes(params["ln1_g"]), _pad_lanes(params["ln1_b"])
    bi = _pad_lanes(params["inner_b"])
    g2, b2 = _pad_lanes(params["ln2_g"]), _pad_lanes(params["ln2_b"])

    kernel = functools.partial(_encoder_kernel, n_etypes=e_, d_real=D)
    out_p = pl.pallas_call(
        kernel,
        out_shape=jax.ShapeDtypeStruct((b_, n_, DP), jnp.float32),
        grid=(b_,),
        in_specs=[
            pl.BlockSpec((1, n_, DP), lambda b: (b, 0, 0)),         # x (lane-padded)
            pl.BlockSpec((1, e_, n_, n_), lambda b: (b, 0, 0, 0)),  # normalized adjacency
            pl.BlockSpec((1, e_, n_, 1), lambda b: (b, 0, 0, 0)),   # deg>0 mask
            _bcast_spec(w11.shape), _bcast_spec(w12.shape),         # gnn1 weights
            _bcast_spec(w21.shape), _bcast_spec(w22.shape),         # gnn2 weights
            _bcast_spec(g1.shape), _bcast_spec(b1.shape),           # LayerNorm 1 affine
            _bcast_spec(wi.shape), _bcast_spec(bi.shape),           # inner Linear
            _bcast_spec(g2.shape), _bcast_spec(b2.shape),           # LayerNorm 2 affine
        ],
        out_specs=pl.BlockSpec((1, n_, DP), lambda b: (b, 0, 0)),
        compiler_params=pltpu.CompilerParams(
            dimension_semantics=("parallel",)),                      # shard graphs across TCs
    )(xp, a_norm, mask, w11, w12, w21, w22, g1, b1, wi, bi, g2, b2)
    return out_p[..., :D]                                            # drop padding lanes


# ---------------------------------------------------------------------------
# Parameters and pure-JAX reference (intended module semantics, unpadded)
# ---------------------------------------------------------------------------
def init_params(key):
    ks = jax.random.split(key, 6)
    scale = 0.1
    return {
        # per-edge-type MLP weights, pre-transposed to (in, out)
        "gnn1_w1": scale * jax.random.normal(ks[0], (E, D, H), jnp.float32),
        "gnn1_w2": scale * jax.random.normal(ks[1], (E, H, D), jnp.float32),
        "gnn2_w1": scale * jax.random.normal(ks[2], (E, D, H), jnp.float32),
        "gnn2_w2": scale * jax.random.normal(ks[3], (E, H, D), jnp.float32),
        # LayerNorm affine params, kept 2D (1, D)
        "ln1_g": jnp.ones((1, D), jnp.float32),
        "ln1_b": jnp.zeros((1, D), jnp.float32),
        "ln2_g": jnp.ones((1, D), jnp.float32),
        "ln2_b": jnp.zeros((1, D), jnp.float32),
        # inner nn.Linear(dim_out, dim_out) weight (pre-transposed) + bias
        "inner_w": scale * jax.random.normal(ks[4], (D, D), jnp.float32),
        "inner_b": scale * jax.random.normal(ks[5], (1, D), jnp.float32),
    }


def _reference_single(x, adj, params):
    hp = jax.lax.Precision.HIGHEST

    def mlp_gnn(x, w1, w2):
        for e in range(adj.shape[0]):
            h = jnp.maximum(jnp.dot(x, w1[e], precision=hp), 0.0)
            m = jnp.dot(h, w2[e], precision=hp)
            a = adj[e]
            deg = jnp.sum(a, axis=1, keepdims=True)
            mean = jnp.dot(a, m, precision=hp) / jnp.maximum(deg, 1.0)
            x = jnp.where(deg > 0.0, mean, x)
        return x

    def layer_norm(x, g, b):
        mu = jnp.mean(x, axis=-1, keepdims=True)
        var = jnp.mean(jnp.square(x - mu), axis=-1, keepdims=True)
        return (x - mu) * jax.lax.rsqrt(var + EPS) * g + b

    h = mlp_gnn(x, params["gnn1_w1"], params["gnn1_w2"])
    h = layer_norm(h, params["ln1_g"], params["ln1_b"])
    h = jnp.maximum(jnp.dot(h, params["inner_w"], precision=hp) + params["inner_b"], 0.0)
    h = mlp_gnn(h, params["gnn2_w1"], params["gnn2_w2"])
    h = layer_norm(h, params["ln2_g"], params["ln2_b"])
    return h


if __name__ == "__main__":
    key = jax.random.PRNGKey(0)
    k_x, k_adj, k_p = jax.random.split(key, 3)

    # batch of graphs: node features and dense per-etype adjacency
    x = jax.random.normal(k_x, (B, N, D), jnp.float32)
    adj = jax.random.bernoulli(k_adj, 0.3, (B, E, N, N)).astype(jnp.float32)
    params = init_params(k_p)

    out = jax.jit(gnn_encoder_forward)(x, adj, params)
    out = jax.block_until_ready(out)
    assert out.shape == (B, N, D) and out.dtype == jnp.float32

    ref = jax.vmap(lambda xb, ab: _reference_single(xb, ab, params))(x, adj)
    err = float(jnp.max(jnp.abs(out - ref)))
    assert err < 5e-2, f"max abs error vs reference: {err}"
    print("KERNEL_OK")
</pallas_src>

<mosaic_0001>
module attributes {stable_mosaic.version = 11 : i64} {
  func.func @_encoder_kernel(%arg0: i32, %arg1: memref<1x16x128xf32, #tpu.memory_space<vmem>>, %arg2: memref<1x2x16x16xf32, #tpu.memory_space<vmem>>, %arg3: memref<1x2x16x1xf32, #tpu.memory_space<vmem>>, %arg4: memref<2x128x128xf32, #tpu.memory_space<vmem>>, %arg5: memref<2x128x128xf32, #tpu.memory_space<vmem>>, %arg6: memref<2x128x128xf32, #tpu.memory_space<vmem>>, %arg7: memref<2x128x128xf32, #tpu.memory_space<vmem>>, %arg8: memref<1x128xf32, #tpu.memory_space<vmem>>, %arg9: memref<1x128xf32, #tpu.memory_space<vmem>>, %arg10: memref<128x128xf32, #tpu.memory_space<vmem>>, %arg11: memref<1x128xf32, #tpu.memory_space<vmem>>, %arg12: memref<1x128xf32, #tpu.memory_space<vmem>>, %arg13: memref<1x128xf32, #tpu.memory_space<vmem>>, %arg14: memref<1x16x128xf32, #tpu.memory_space<vmem>>) attributes {dimension_semantics = [#tpu.dimension_semantics<parallel>], iteration_bounds = array<i64: 4>, scalar_prefetch = 0 : i64, scratch_operands = 0 : i64, tpu.core_type = #tpu.core_type<tc>, window_params = [{transform_indices = @transform_0, window_bounds = array<i64: 1, 16, 128>}, {transform_indices = @transform_1, window_bounds = array<i64: 1, 2, 16, 16>}, {transform_indices = @transform_2, window_bounds = array<i64: 1, 2, 16, 1>}, {pipeline_mode = #tpu.pipeline_mode<synchronous>, transform_indices = @transform_3, window_bounds = array<i64: 2, 128, 128>}, {pipeline_mode = #tpu.pipeline_mode<synchronous>, transform_indices = @transform_4, window_bounds = array<i64: 2, 128, 128>}, {pipeline_mode = #tpu.pipeline_mode<synchronous>, transform_indices = @transform_5, window_bounds = array<i64: 2, 128, 128>}, {pipeline_mode = #tpu.pipeline_mode<synchronous>, transform_indices = @transform_6, window_bounds = array<i64: 2, 128, 128>}, {pipeline_mode = #tpu.pipeline_mode<synchronous>, transform_indices = @transform_7, window_bounds = array<i64: 1, 128>}, {pipeline_mode = #tpu.pipeline_mode<synchronous>, transform_indices = @transform_8, window_bounds = array<i64: 1, 128>}, {pipeline_mode = #tpu.pipeline_mode<synchronous>, transform_indices = @transform_9, window_bounds = array<i64: 128, 128>}, {pipeline_mode = #tpu.pipeline_mode<synchronous>, transform_indices = @transform_10, window_bounds = array<i64: 1, 128>}, {pipeline_mode = #tpu.pipeline_mode<synchronous>, transform_indices = @transform_11, window_bounds = array<i64: 1, 128>}, {pipeline_mode = #tpu.pipeline_mode<synchronous>, transform_indices = @transform_12, window_bounds = array<i64: 1, 128>}, {transform_indices = @transform_13, window_bounds = array<i64: 1, 16, 128>}]} {
    %0 = tpu.iota {dimensions = array<i32: 1>} : vector<1x128xi32>
    %c32_i32 = arith.constant 32 : i32
    %1 = vector.broadcast %c32_i32 : i32 to vector<1x128xi32>
    %2 = arith.cmpi slt, %0, %1 : vector<1x128xi32>
    %3 = arith.extui %2 : vector<1x128xi1> to vector<1x128xi32>
    %4 = arith.sitofp %3 : vector<1x128xi32> to vector<1x128xf32>
    %c0 = arith.constant 0 : index
    %c0_0 = arith.constant 0 : index
    %c0_1 = arith.constant 0 : index
    %5 = vector.load %arg1[%c0, %c0_0, %c0_1] : memref<1x16x128xf32, #tpu.memory_space<vmem>>, vector<1x16x128xf32>
    %6 = vector.shape_cast %5 : vector<1x16x128xf32> to vector<16x128xf32>
    %c0_2 = arith.constant 0 : index
    %c0_3 = arith.constant 0 : index
    %c0_4 = arith.constant 0 : index
    %c0_5 = arith.constant 0 : index
    %7 = vector.load %arg2[%c0_2, %c0_3, %c0_4, %c0_5] : memref<1x2x16x16xf32, #tpu.memory_space<vmem>>, vector<1x2x16x16xf32>
    %8 = vector.shape_cast %7 : vector<1x2x16x16xf32> to vector<2x16x16xf32>
    %c0_6 = arith.constant 0 : index
    %c0_7 = arith.constant 0 : index
    %c0_8 = arith.constant 0 : index
    %c0_9 = arith.constant 0 : index
    %9 = vector.load %arg3[%c0_6, %c0_7, %c0_8, %c0_9] : memref<1x2x16x1xf32, #tpu.memory_space<vmem>>, vector<1x2x16x1xf32>
    %10 = vector.shape_cast %9 : vector<1x2x16x1xf32> to vector<2x16x1xf32>
    %c0_10 = arith.constant 0 : index
    %c0_11 = arith.constant 0 : index
    %c0_12 = arith.constant 0 : index
    %11 = vector.load %arg4[%c0_10, %c0_11, %c0_12] : memref<2x128x128xf32, #tpu.memory_space<vmem>>, vector<1x128x128xf32>
    %12 = vector.shape_cast %11 : vector<1x128x128xf32> to vector<128x128xf32>
    %cst = arith.constant dense<0.000000e+00> : vector<16x128xf32>
    %13 = tpu.matmul %6, %12, %cst {dimension_numbers = #tpu.dot_dimension_numbers<[1], [0], [0], [1], [0, 0, 1, 1], [], []>} : vector<16x128xf32>, vector<128x128xf32>, vector<16x128xf32> -> vector<16x128xf32>
    %cst_13 = arith.constant 0.000000e+00 : f32
    %14 = vector.broadcast %cst_13 : f32 to vector<16x128xf32>
    %15 = arith.maximumf %13, %14 : vector<16x128xf32>
    %c0_14 = arith.constant 0 : index
    %c0_15 = arith.constant 0 : index
    %c0_16 = arith.constant 0 : index
    %16 = vector.load %arg5[%c0_14, %c0_15, %c0_16] : memref<2x128x128xf32, #tpu.memory_space<vmem>>, vector<1x128x128xf32>
    %17 = vector.shape_cast %16 : vector<1x128x128xf32> to vector<128x128xf32>
    %cst_17 = arith.constant dense<0.000000e+00> : vector<16x128xf32>
    %18 = tpu.matmul %15, %17, %cst_17 {dimension_numbers = #tpu.dot_dimension_numbers<[1], [0], [0], [1], [0, 0, 1, 1], [], []>} : vector<16x128xf32>, vector<128x128xf32>, vector<16x128xf32> -> vector<16x128xf32>
    %19 = vector.extract_strided_slice %8 {offsets = [0, 0, 0], sizes = [1, 16, 16], strides = [1, 1, 1]} : vector<2x16x16xf32> to vector<1x16x16xf32>
    %20 = vector.shape_cast %19 : vector<1x16x16xf32> to vector<16x16xf32>
    %cst_18 = arith.constant dense<0.000000e+00> : vector<16x128xf32>
    %21 = tpu.matmul %20, %18, %cst_18 {dimension_numbers = #tpu.dot_dimension_numbers<[1], [0], [0], [1], [0, 0, 1, 1], [], []>} : vector<16x16xf32>, vector<16x128xf32>, vector<16x128xf32> -> vector<16x128xf32>
    %22 = vector.extract_strided_slice %10 {offsets = [0, 0, 0], sizes = [1, 16, 1], strides = [1, 1, 1]} : vector<2x16x1xf32> to vector<1x16x1xf32>
    %23 = vector.shape_cast %22 : vector<1x16x1xf32> to vector<16x1xf32>
    %cst_19 = arith.constant 0.000000e+00 : f32
    %24 = vector.broadcast %cst_19 : f32 to vector<16x1xf32>
    %25 = arith.cmpf ogt, %23, %24 : vector<16x1xf32>
    %26 = vector.shape_cast %25 : vector<16x1xi1> to vector<16x1xi1>
    %27 = vector.broadcast %26 : vector<16x1xi1> to vector<16x128xi1>
    %28 = arith.select %27, %21, %6 : vector<16x128xi1>, vector<16x128xf32>
    %c1 = arith.constant 1 : index
    %c0_20 = arith.constant 0 : index
    %c0_21 = arith.constant 0 : index
    %29 = vector.load %arg4[%c1, %c0_20, %c0_21] : memref<2x128x128xf32, #tpu.memory_space<vmem>>, vector<1x128x128xf32>
    %30 = vector.shape_cast %29 : vector<1x128x128xf32> to vector<128x128xf32>
    %cst_22 = arith.constant dense<0.000000e+00> : vector<16x128xf32>
    %31 = tpu.matmul %28, %30, %cst_22 {dimension_numbers = #tpu.dot_dimension_numbers<[1], [0], [0], [1], [0, 0, 1, 1], [], []>} : vector<16x128xf32>, vector<128x128xf32>, vector<16x128xf32> -> vector<16x128xf32>
    %cst_23 = arith.constant 0.000000e+00 : f32
    %32 = vector.broadcast %cst_23 : f32 to vector<16x128xf32>
    %33 = arith.maximumf %31, %32 : vector<16x128xf32>
    %c1_24 = arith.constant 1 : index
    %c0_25 = arith.constant 0 : index
    %c0_26 = arith.constant 0 : index
    %34 = vector.load %arg5[%c1_24, %c0_25, %c0_26] : memref<2x128x128xf32, #tpu.memory_space<vmem>>, vector<1x128x128xf32>
    %35 = vector.shape_cast %34 : vector<1x128x128xf32> to vector<128x128xf32>
    %cst_27 = arith.constant dense<0.000000e+00> : vector<16x128xf32>
    %36 = tpu.matmul %33, %35, %cst_27 {dimension_numbers = #tpu.dot_dimension_numbers<[1], [0], [0], [1], [0, 0, 1, 1], [], []>} : vector<16x128xf32>, vector<128x128xf32>, vector<16x128xf32> -> vector<16x128xf32>
    %37 = vector.extract_strided_slice %8 {offsets = [1, 0, 0], sizes = [1, 16, 16], strides = [1, 1, 1]} : vector<2x16x16xf32> to vector<1x16x16xf32>
    %38 = vector.shape_cast %37 : vector<1x16x16xf32> to vector<16x16xf32>
    %cst_28 = arith.constant dense<0.000000e+00> : vector<16x128xf32>
    %39 = tpu.matmul %38, %36, %cst_28 {dimension_numbers = #tpu.dot_dimension_numbers<[1], [0], [0], [1], [0, 0, 1, 1], [], []>} : vector<16x16xf32>, vector<16x128xf32>, vector<16x128xf32> -> vector<16x128xf32>
    %40 = vector.extract_strided_slice %10 {offsets = [1, 0, 0], sizes = [1, 16, 1], strides = [1, 1, 1]} : vector<2x16x1xf32> to vector<1x16x1xf32>
    %41 = vector.shape_cast %40 : vector<1x16x1xf32> to vector<16x1xf32>
    %cst_29 = arith.constant 0.000000e+00 : f32
    %42 = vector.broadcast %cst_29 : f32 to vector<16x1xf32>
    %43 = arith.cmpf ogt, %41, %42 : vector<16x1xf32>
    %44 = vector.shape_cast %43 : vector<16x1xi1> to vector<16x1xi1>
    %45 = vector.broadcast %44 : vector<16x1xi1> to vector<16x128xi1>
    %46 = arith.select %45, %39, %28 : vector<16x128xi1>, vector<16x128xf32>
    %c0_30 = arith.constant 0 : index
    %c0_31 = arith.constant 0 : index
    %47 = vector.load %arg8[%c0_30, %c0_31] : memref<1x128xf32, #tpu.memory_space<vmem>>, vector<1x128xf32>
    %c0_32 = arith.constant 0 : index
    %c0_33 = arith.constant 0 : index
    %48 = vector.load %arg9[%c0_32, %c0_33] : memref<1x128xf32, #tpu.memory_space<vmem>>, vector<1x128xf32>
    %cst_34 = arith.constant dense<0.000000e+00> : vector<16xf32>
    %49 = vector.multi_reduction <add>, %46, %cst_34 [1] : vector<16x128xf32> to vector<16xf32>
    %50 = vector.shape_cast %49 : vector<16xf32> to vector<16x1xf32>
    %cst_35 = arith.constant 3.125000e-02 : f32
    %51 = vector.broadcast %cst_35 : f32 to vector<16x1xf32>
    %52 = arith.mulf %50, %51 : vector<16x1xf32>
    %53 = vector.broadcast %52 : vector<16x1xf32> to vector<16x128xf32>
    %54 = arith.subf %46, %53 : vector<16x128xf32>
    %55 = vector.broadcast %4 : vector<1x128xf32> to vector<16x128xf32>
    %56 = arith.mulf %54, %55 : vector<16x128xf32>
    %57 = arith.mulf %56, %56 : vector<16x128xf32>
    %cst_36 = arith.constant dense<0.000000e+00> : vector<16xf32>
    %58 = vector.multi_reduction <add>, %57, %cst_36 [1] : vector<16x128xf32> to vector<16xf32>
    %59 = vector.shape_cast %58 : vector<16xf32> to vector<16x1xf32>
    %cst_37 = arith.constant 3.125000e-02 : f32
    %60 = vector.broadcast %cst_37 : f32 to vector<16x1xf32>
    %61 = arith.mulf %59, %60 : vector<16x1xf32>
    %cst_38 = arith.constant 9.99999974E-6 : f32
    %62 = vector.broadcast %cst_38 : f32 to vector<16x1xf32>
    %63 = arith.addf %61, %62 : vector<16x1xf32>
    %64 = math.rsqrt %63 : vector<16x1xf32>
    %65 = vector.broadcast %64 : vector<16x1xf32> to vector<16x128xf32>
    %66 = arith.mulf %56, %65 : vector<16x128xf32>
    %67 = vector.broadcast %47 : vector<1x128xf32> to vector<16x128xf32>
    %68 = arith.mulf %66, %67 : vector<16x128xf32>
    %69 = vector.broadcast %48 : vector<1x128xf32> to vector<16x128xf32>
    %70 = arith.addf %68, %69 : vector<16x128xf32>
    %c0_39 = arith.constant 0 : index
    %c0_40 = arith.constant 0 : index
    %71 = vector.load %arg10[%c0_39, %c0_40] : memref<128x128xf32, #tpu.memory_space<vmem>>, vector<128x128xf32>
    %cst_41 = arith.constant dense<0.000000e+00> : vector<16x128xf32>
    %72 = tpu.matmul %70, %71, %cst_41 {dimension_numbers = #tpu.dot_dimension_numbers<[1], [0], [0], [1], [0, 0, 1, 1], [], []>} : vector<16x128xf32>, vector<128x128xf32>, vector<16x128xf32> -> vector<16x128xf32>
    %c0_42 = arith.constant 0 : index
    %c0_43 = arith.constant 0 : index
    %73 = vector.load %arg11[%c0_42, %c0_43] : memref<1x128xf32, #tpu.memory_space<vmem>>, vector<1x128xf32>
    %74 = vector.broadcast %73 : vector<1x128xf32> to vector<16x128xf32>
    %75 = arith.addf %72, %74 : vector<16x128xf32>
    %cst_44 = arith.constant 0.000000e+00 : f32
    %76 = vector.broadcast %cst_44 : f32 to vector<16x128xf32>
    %77 = arith.maximumf %75, %76 : vector<16x128xf32>
    %c0_45 = arith.constant 0 : index
    %c0_46 = arith.constant 0 : index
    %c0_47 = arith.constant 0 : index
    %78 = vector.load %arg6[%c0_45, %c0_46, %c0_47] : memref<2x128x128xf32, #tpu.memory_space<vmem>>, vector<1x128x128xf32>
    %79 = vector.shape_cast %78 : vector<1x128x128xf32> to vector<128x128xf32>
    %cst_48 = arith.constant dense<0.000000e+00> : vector<16x128xf32>
    %80 = tpu.matmul %77, %79, %cst_48 {dimension_numbers = #tpu.dot_dimension_numbers<[1], [0], [0], [1], [0, 0, 1, 1], [], []>} : vector<16x128xf32>, vector<128x128xf32>, vector<16x128xf32> -> vector<16x128xf32>
    %cst_49 = arith.constant 0.000000e+00 : f32
    %81 = vector.broadcast %cst_49 : f32 to vector<16x128xf32>
    %82 = arith.maximumf %80, %81 : vector<16x128xf32>
    %c0_50 = arith.constant 0 : index
    %c0_51 = arith.constant 0 : index
    %c0_52 = arith.constant 0 : index
    %83 = vector.load %arg7[%c0_50, %c0_51, %c0_52] : memref<2x128x128xf32, #tpu.memory_space<vmem>>, vector<1x128x128xf32>
    %84 = vector.shape_cast %83 : vector<1x128x128xf32> to vector<128x128xf32>
    %cst_53 = arith.constant dense<0.000000e+00> : vector<16x128xf32>
    %85 = tpu.matmul %82, %84, %cst_53 {dimension_numbers = #tpu.dot_dimension_numbers<[1], [0], [0], [1], [0, 0, 1, 1], [], []>} : vector<16x128xf32>, vector<128x128xf32>, vector<16x128xf32> -> vector<16x128xf32>
    %86 = vector.extract_strided_slice %8 {offsets = [0, 0, 0], sizes = [1, 16, 16], strides = [1, 1, 1]} : vector<2x16x16xf32> to vector<1x16x16xf32>
    %87 = vector.shape_cast %86 : vector<1x16x16xf32> to vector<16x16xf32>
    %cst_54 = arith.constant dense<0.000000e+00> : vector<16x128xf32>
    %88 = tpu.matmul %87, %85, %cst_54 {dimension_numbers = #tpu.dot_dimension_numbers<[1], [0], [0], [1], [0, 0, 1, 1], [], []>} : vector<16x16xf32>, vector<16x128xf32>, vector<16x128xf32> -> vector<16x128xf32>
    %89 = vector.extract_strided_slice %10 {offsets = [0, 0, 0], sizes = [1, 16, 1], strides = [1, 1, 1]} : vector<2x16x1xf32> to vector<1x16x1xf32>
    %90 = vector.shape_cast %89 : vector<1x16x1xf32> to vector<16x1xf32>
    %cst_55 = arith.constant 0.000000e+00 : f32
    %91 = vector.broadcast %cst_55 : f32 to vector<16x1xf32>
    %92 = arith.cmpf ogt, %90, %91 : vector<16x1xf32>
    %93 = vector.shape_cast %92 : vector<16x1xi1> to vector<16x1xi1>
    %94 = vector.broadcast %93 : vector<16x1xi1> to vector<16x128xi1>
    %95 = arith.select %94, %88, %77 : vector<16x128xi1>, vector<16x128xf32>
    %c1_56 = arith.constant 1 : index
    %c0_57 = arith.constant 0 : index
    %c0_58 = arith.constant 0 : index
    %96 = vector.load %arg6[%c1_56, %c0_57, %c0_58] : memref<2x128x128xf32, #tpu.memory_space<vmem>>, vector<1x128x128xf32>
    %97 = vector.shape_cast %96 : vector<1x128x128xf32> to vector<128x128xf32>
    %cst_59 = arith.constant dense<0.000000e+00> : vector<16x128xf32>
    %98 = tpu.matmul %95, %97, %cst_59 {dimension_numbers = #tpu.dot_dimension_numbers<[1], [0], [0], [1], [0, 0, 1, 1], [], []>} : vector<16x128xf32>, vector<128x128xf32>, vector<16x128xf32> -> vector<16x128xf32>
    %cst_60 = arith.constant 0.000000e+00 : f32
    %99 = vector.broadcast %cst_60 : f32 to vector<16x128xf32>
    %100 = arith.maximumf %98, %99 : vector<16x128xf32>
    %c1_61 = arith.constant 1 : index
    %c0_62 = arith.constant 0 : index
    %c0_63 = arith.constant 0 : index
    %101 = vector.load %arg7[%c1_61, %c0_62, %c0_63] : memref<2x128x128xf32, #tpu.memory_space<vmem>>, vector<1x128x128xf32>
    %102 = vector.shape_cast %101 : vector<1x128x128xf32> to vector<128x128xf32>
    %cst_64 = arith.constant dense<0.000000e+00> : vector<16x128xf32>
    %103 = tpu.matmul %100, %102, %cst_64 {dimension_numbers = #tpu.dot_dimension_numbers<[1], [0], [0], [1], [0, 0, 1, 1], [], []>} : vector<16x128xf32>, vector<128x128xf32>, vector<16x128xf32> -> vector<16x128xf32>
    %104 = vector.extract_strided_slice %8 {offsets = [1, 0, 0], sizes = [1, 16, 16], strides = [1, 1, 1]} : vector<2x16x16xf32> to vector<1x16x16xf32>
    %105 = vector.shape_cast %104 : vector<1x16x16xf32> to vector<16x16xf32>
    %cst_65 = arith.constant dense<0.000000e+00> : vector<16x128xf32>
    %106 = tpu.matmul %105, %103, %cst_65 {dimension_numbers = #tpu.dot_dimension_numbers<[1], [0], [0], [1], [0, 0, 1, 1], [], []>} : vector<16x16xf32>, vector<16x128xf32>, vector<16x128xf32> -> vector<16x128xf32>
    %107 = vector.extract_strided_slice %10 {offsets = [1, 0, 0], sizes = [1, 16, 1], strides = [1, 1, 1]} : vector<2x16x1xf32> to vector<1x16x1xf32>
    %108 = vector.shape_cast %107 : vector<1x16x1xf32> to vector<16x1xf32>
    %cst_66 = arith.constant 0.000000e+00 : f32
    %109 = vector.broadcast %cst_66 : f32 to vector<16x1xf32>
    %110 = arith.cmpf ogt, %108, %109 : vector<16x1xf32>
    %111 = vector.shape_cast %110 : vector<16x1xi1> to vector<16x1xi1>
    %112 = vector.broadcast %111 : vector<16x1xi1> to vector<16x128xi1>
    %113 = arith.select %112, %106, %95 : vector<16x128xi1>, vector<16x128xf32>
    %c0_67 = arith.constant 0 : index
    %c0_68 = arith.constant 0 : index
    %114 = vector.load %arg12[%c0_67, %c0_68] : memref<1x128xf32, #tpu.memory_space<vmem>>, vector<1x128xf32>
    %c0_69 = arith.constant 0 : index
    %c0_70 = arith.constant 0 : index
    %115 = vector.load %arg13[%c0_69, %c0_70] : memref<1x128xf32, #tpu.memory_space<vmem>>, vector<1x128xf32>
    %cst_71 = arith.constant dense<0.000000e+00> : vector<16xf32>
    %116 = vector.multi_reduction <add>, %113, %cst_71 [1] : vector<16x128xf32> to vector<16xf32>
    %117 = vector.shape_cast %116 : vector<16xf32> to vector<16x1xf32>
    %cst_72 = arith.constant 3.125000e-02 : f32
    %118 = vector.broadcast %cst_72 : f32 to vector<16x1xf32>
    %119 = arith.mulf %117, %118 : vector<16x1xf32>
    %120 = vector.broadcast %119 : vector<16x1xf32> to vector<16x128xf32>
    %121 = arith.subf %113, %120 : vector<16x128xf32>
    %122 = vector.broadcast %4 : vector<1x128xf32> to vector<16x128xf32>
    %123 = arith.mulf %121, %122 : vector<16x128xf32>
    %124 = arith.mulf %123, %123 : vector<16x128xf32>
    %cst_73 = arith.constant dense<0.000000e+00> : vector<16xf32>
    %125 = vector.multi_reduction <add>, %124, %cst_73 [1] : vector<16x128xf32> to vector<16xf32>
    %126 = vector.shape_cast %125 : vector<16xf32> to vector<16x1xf32>
    %cst_74 = arith.constant 3.125000e-02 : f32
    %127 = vector.broadcast %cst_74 : f32 to vector<16x1xf32>
    %128 = arith.mulf %126, %127 : vector<16x1xf32>
    %cst_75 = arith.constant 9.99999974E-6 : f32
    %129 = vector.broadcast %cst_75 : f32 to vector<16x1xf32>
    %130 = arith.addf %128, %129 : vector<16x1xf32>
    %131 = math.rsqrt %130 : vector<16x1xf32>
    %132 = vector.broadcast %131 : vector<16x1xf32> to vector<16x128xf32>
    %133 = arith.mulf %123, %132 : vector<16x128xf32>
    %134 = vector.broadcast %114 : vector<1x128xf32> to vector<16x128xf32>
    %135 = arith.mulf %133, %134 : vector<16x128xf32>
    %136 = vector.broadcast %115 : vector<1x128xf32> to vector<16x128xf32>
    %137 = arith.addf %135, %136 : vector<16x128xf32>
    %c0_76 = arith.constant 0 : index
    %c0_77 = arith.constant 0 : index
    %c0_78 = arith.constant 0 : index
    %138 = vector.load %arg14[%c0_76, %c0_77, %c0_78] : memref<1x16x128xf32, #tpu.memory_space<vmem>>, vector<1x16x128xf32>
    %139 = vector.shape_cast %138 : vector<1x16x128xf32> to vector<16x128xf32>
    %140 = vector.shape_cast %137 : vector<16x128xf32> to vector<1x16x128xf32>
    tpu.vector_store %arg14[%c0_76, %c0_77, %c0_78], %140 {strides = array<i32>} : memref<1x16x128xf32, #tpu.memory_space<vmem>>, vector<1x16x128xf32>,
    return
  }
  func.func @transform_0(%arg0: i32) -> (i32, i32, i32) {
    %c0_i32 = arith.constant 0 : i32
    %c0_i32_0 = arith.constant 0 : i32
    %c0_i32_1 = arith.constant 0 : i32
    return %arg0, %c0_i32, %c0_i32_0 : i32, i32, i32
  }
  func.func @transform_1(%arg0: i32) -> (i32, i32, i32, i32) {
    %c0_i32 = arith.constant 0 : i32
    %c0_i32_0 = arith.constant 0 : i32
    %c0_i32_1 = arith.constant 0 : i32
    %c0_i32_2 = arith.constant 0 : i32
    return %arg0, %c0_i32, %c0_i32_0, %c0_i32_1 : i32, i32, i32, i32
  }
  func.func @transform_2(%arg0: i32) -> (i32, i32, i32, i32) {
    %c0_i32 = arith.constant 0 : i32
    %c0_i32_0 = arith.constant 0 : i32
    %c0_i32_1 = arith.constant 0 : i32
    %c0_i32_2 = arith.constant 0 : i32
    return %arg0, %c0_i32, %c0_i32_0, %c0_i32_1 : i32, i32, i32, i32
  }
  func.func @transform_3(%arg0: i32) -> (i32, i32, i32) {
    %c0_i32 = arith.constant 0 : i32
    %c0_i32_0 = arith.constant 0 : i32
    %c0_i32_1 = arith.constant 0 : i32
    %c0_i32_2 = arith.constant 0 : i32
    return %c0_i32, %c0_i32_0, %c0_i32_1 : i32, i32, i32
  }
  func.func @transform_4(%arg0: i32) -> (i32, i32, i32) {
    %c0_i32 = arith.constant 0 : i32
    %c0_i32_0 = arith.constant 0 : i32
    %c0_i32_1 = arith.constant 0 : i32
    %c0_i32_2 = arith.constant 0 : i32
    return %c0_i32, %c0_i32_0, %c0_i32_1 : i32, i32, i32
  }
  func.func @transform_5(%arg0: i32) -> (i32, i32, i32) {
    %c0_i32 = arith.constant 0 : i32
    %c0_i32_0 = arith.constant 0 : i32
    %c0_i32_1 = arith.constant 0 : i32
    %c0_i32_2 = arith.constant 0 : i32
    return %c0_i32, %c0_i32_0, %c0_i32_1 : i32, i32, i32
  }
  func.func @transform_6(%arg0: i32) -> (i32, i32, i32) {
    %c0_i32 = arith.constant 0 : i32
    %c0_i32_0 = arith.constant 0 : i32
    %c0_i32_1 = arith.constant 0 : i32
    %c0_i32_2 = arith.constant 0 : i32
    return %c0_i32, %c0_i32_0, %c0_i32_1 : i32, i32, i32
  }
  func.func @transform_7(%arg0: i32) -> (i32, i32) {
    %c0_i32 = arith.constant 0 : i32
    %c0_i32_0 = arith.constant 0 : i32
    %c0_i32_1 = arith.constant 0 : i32
    return %c0_i32, %c0_i32_0 : i32, i32
  }
  func.func @transform_8(%arg0: i32) -> (i32, i32) {
    %c0_i32 = arith.constant 0 : i32
    %c0_i32_0 = arith.constant 0 : i32
    %c0_i32_1 = arith.constant 0 : i32
    return %c0_i32, %c0_i32_0 : i32, i32
  }
  func.func @transform_9(%arg0: i32) -> (i32, i32) {
    %c0_i32 = arith.constant 0 : i32
    %c0_i32_0 = arith.constant 0 : i32
    %c0_i32_1 = arith.constant 0 : i32
    return %c0_i32, %c0_i32_0 : i32, i32
  }
  func.func @transform_10(%arg0: i32) -> (i32, i32) {
    %c0_i32 = arith.constant 0 : i32
    %c0_i32_0 = arith.constant 0 : i32
    %c0_i32_1 = arith.constant 0 : i32
    return %c0_i32, %c0_i32_0 : i32, i32
  }
  func.func @transform_11(%arg0: i32) -> (i32, i32) {
    %c0_i32 = arith.constant 0 : i32
    %c0_i32_0 = arith.constant 0 : i32
    %c0_i32_1 = arith.constant 0 : i32
    return %c0_i32, %c0_i32_0 : i32, i32
  }
  func.func @transform_12(%arg0: i32) -> (i32, i32) {
    %c0_i32 = arith.constant 0 : i32
    %c0_i32_0 = arith.constant 0 : i32
    %c0_i32_1 = arith.constant 0 : i32
    return %c0_i32, %c0_i32_0 : i32, i32
  }
  func.func @transform_13(%arg0: i32) -> (i32, i32, i32) {
    %c0_i32 = arith.constant 0 : i32
    %c0_i32_0 = arith.constant 0 : i32
    %c0_i32_1 = arith.constant 0 : i32
    return %arg0, %c0_i32, %c0_i32_0 : i32, i32, i32
  }
}

</mosaic_0001>

<llo_original>
// kernel: gnn_encoder_forward.1
$region0: #{gnn_encoder_forward.1}
  #allocation0 [shape = 'u32[]', space=smem, size = 0x4, offset = 0x4, fixed_abs, tag = 'smem constant byte address 0x4 - core index']
  #allocation1 [shape = 'u32[144,128]{1,0:T(1,128)}', space=vmem, size = 0x12000, scoped, tag = 'internal scratch']
  %s0 = inlined_call_operand.vmem [shape: f32[4,16,128], index: 0, kind: input, shape index: {}]
  %s1 = inlined_call_operand.vmem [shape: f32[4,2,16,16], index: 1, kind: input, shape index: {}]
  %s2 = inlined_call_operand.vmem [shape: f32[4,2,16,1], index: 2, kind: input, shape index: {}]
  %s3 = inlined_call_operand.vmem [shape: f32[2,128,128], index: 3, kind: input, shape index: {}]
  %s4 = inlined_call_operand.vmem [shape: f32[2,128,128], index: 4, kind: input, shape index: {}]
  %s5 = inlined_call_operand.vmem [shape: f32[2,128,128], index: 5, kind: input, shape index: {}]
  %s6 = inlined_call_operand.vmem [shape: f32[2,128,128], index: 6, kind: input, shape index: {}]
  %s7 = inlined_call_operand.vmem [shape: f32[1,128], index: 7, kind: input, shape index: {}]
  %s8 = inlined_call_operand.vmem [shape: f32[1,128], index: 8, kind: input, shape index: {}]
  %s9 = inlined_call_operand.vmem [shape: f32[128,128], index: 9, kind: input, shape index: {}]
  %s10 = inlined_call_operand.vmem [shape: f32[1,128], index: 10, kind: input, shape index: {}]
  %s11 = inlined_call_operand.vmem [shape: f32[1,128], index: 11, kind: input, shape index: {}]
  %s12 = inlined_call_operand.vmem [shape: f32[1,128], index: 12, kind: input, shape index: {}]
  %s13 = inlined_call_operand.hbm [shape: f32[4,16,128], index: 13, kind: output, shape index: {}]
  %s14 = sld [smem:[#allocation0]]
  $region85: #{gnn_encoder_forward.1} parent=0
    _
  %s16 = ssub.s32 1, %s14
  %s17 = scalar_select 0, %s16, %s14
  $region1: #{gnn_encoder_forward.1} parent=0
    #allocation2 [shape = 'u8[16384]{0}', space=vmem, size = 0x4000, scoped, tag = 'output window, operand 0']
    #allocation3 [shape = 's32[2]{0}', space=sflag, size = 0x8, scoped, tag = 'scoped memory for gnn_encoder_forward.1']
    %18 = vsyncpa [#allocation3], 0
    %s19 = scalar_lea.sflag [#allocation3], 1
    %20 = vsyncpa %s19, 0
    loop: start=0, step=1, limit=6
    $region2: #{gnn_encoder_forward.1} parent=1 // loop_pre_header
      _
    $region3: #{gnn_encoder_forward.1} parent=1 // loop_header
      %s22 = sphi 0, %s26
      %p23 = scmp.ge.s32.totalorder %s22, 6
      %s32 = sphi 0, %s34
      %s35 = sphi 0, %s32
      %s36 = sphi 0, %s35
      %s52 = sphi 0, %s36
      %s58 = sphi 0, %s60
      %s61 = sphi 0, %s58
      %s62 = sphi 0, %s61
      %s78 = sphi 0, %s62
      %s84 = sphi 0, %s86
      %s87 = sphi 0, %s84
      %s88 = sphi 0, %s87
      %s104 = sphi 0, %s88
      %s108 = sphi 0, %s108
      %s110 = sphi 0, %s108
      %s111 = sphi 0, %s110
      %s125 = sphi 0, %s111
      %s129 = sphi 0, %s129
      %s131 = sphi 0, %s129
      %s132 = sphi 0, %s131
      %s146 = sphi 0, %s132
      %s150 = sphi 0, %s150
      %s152 = sphi 0, %s150
      %s153 = sphi 0, %s152
      %s167 = sphi 0, %s153
      %s171 = sphi 0, %s171
      %s173 = sphi 0, %s171
      %s174 = sphi 0, %s173
      %s188 = sphi 0, %s174
      %s192 = sphi 0, %s192
      %s194 = sphi 0, %s192
      %s195 = sphi 0, %s194
      %s209 = sphi 0, %s195
      %s213 = sphi 0, %s213
      %s215 = sphi 0, %s213
      %s216 = sphi 0, %s215
      %s230 = sphi 0, %s216
      %s234 = sphi 0, %s234
      %s236 = sphi 0, %s234
      %s237 = sphi 0, %s236
      %s251 = sphi 0, %s237
      %s255 = sphi 0, %s255
      %s257 = sphi 0, %s255
      %s258 = sphi 0, %s257
      %s272 = sphi 0, %s258
      %s276 = sphi 0, %s276
      %s278 = sphi 0, %s276
      %s279 = sphi 0, %s278
      %s293 = sphi 0, %s279
      %s297 = sphi 0, %s297
      %s299 = sphi 0, %s297
      %s300 = sphi 0, %s299
      %s314 = sphi 0, %s300
      %s320 = sphi 0, %s322
      %s323 = sphi 0, %s320
      %s324 = sphi 0, %s323
      %s340 = sphi 0, %s324
    $region4: #{gnn_encoder_forward.1} parent=1 // loop_header_branch
      %25 = sbr.rel (%p23) target = $region8
    $region5: #{gnn_encoder_forward.1} parent=1 // loop_body
      %s27 = ssub.s32 %s22, 1
      %s28 = ssub.s32 %s22, 2
      %s29 = sadd.s32 %s22, 1
      %s30 = ssub.s32 %s22, %s29
      %p31 = scmp.eq.s32.totalorder %s30, 0
      %s33 = sadd.s32 %s32, 1
      %s34 = scalar_select %p31, %s32, %s33
      %p37 = pneg %p31
      %p38 = scmp.eq.s32.totalorder %s22, 3
      %p39 = por %p37, %p38
      %p40 = scmp.ne.s32.totalorder %s32, %s35
      %p41 = scmp.eq.s32.totalorder %s22, 0
      %p42 = por %p40, %p41
      %p43 = scmp.ne.s32.totalorder %s32, %s35
      %p44 = scmp.eq.s32.totalorder %s27, 3
      %p45 = por %p43, %p44
      %p46 = scmp.ne.s32.totalorder %s35, %s36
      %p47 = scmp.eq.s32.totalorder %s27, 0
      %p48 = por %p46, %p47
      %p49 = scmp.ne.s32.totalorder %s35, %s36
      %p50 = scmp.eq.s32.totalorder %s28, 3
      %p51 = por %p49, %p50
      %p53 = scmp.ne.s32.totalorder %s36, %s52
      %p54 = scmp.eq.s32.totalorder %s28, 0
      %p55 = por %p53, %p54
      %s56 = ssub.s32 %s22, %s29
      %p57 = scmp.eq.s32.totalorder %s56, 0
      %s59 = sadd.s32 %s58, 1
      %s60 = scalar_select %p57, %s58, %s59
      %p63 = pneg %p57
      %p64 = scmp.eq.s32.totalorder %s22, 3
      %p65 = por %p63, %p64
      %p66 = scmp.ne.s32.totalorder %s58, %s61
      %p67 = scmp.eq.s32.totalorder %s22, 0
      %p68 = por %p66, %p67
      %p69 = scmp.ne.s32.totalorder %s58, %s61
      %p70 = scmp.eq.s32.totalorder %s27, 3
      %p71 = por %p69, %p70
      %p72 = scmp.ne.s32.totalorder %s61, %s62
      %p73 = scmp.eq.s32.totalorder %s27, 0
      %p74 = por %p72, %p73
      %p75 = scmp.ne.s32.totalorder %s61, %s62
      %p76 = scmp.eq.s32.totalorder %s28, 3
      %p77 = por %p75, %p76
      %p79 = scmp.ne.s32.totalorder %s62, %s78
      %p80 = scmp.eq.s32.totalorder %s28, 0
      %p81 = por %p79, %p80
      %s82 = ssub.s32 %s22, %s29
      %p83 = scmp.eq.s32.totalorder %s82, 0
      %s85 = sadd.s32 %s84, 1
      %s86 = scalar_select %p83, %s84, %s85
      %p89 = pneg %p83
      %p90 = scmp.eq.s32.totalorder %s22, 3
      %p91 = por %p89, %p90
      %p92 = scmp.ne.s32.totalorder %s84, %s87
      %p93 = scmp.eq.s32.totalorder %s22, 0
      %p94 = por %p92, %p93
      %p95 = scmp.ne.s32.totalorder %s84, %s87
      %p96 = scmp.eq.s32.totalorder %s27, 3
      %p97 = por %p95, %p96
      %p98 = scmp.ne.s32.totalorder %s87, %s88
      %p99 = scmp.eq.s32.totalorder %s27, 0
      %p100 = por %p98, %p99
      %p101 = scmp.ne.s32.totalorder %s87, %s88
      %p102 = scmp.eq.s32.totalorder %s28, 3
      %p103 = por %p101, %p102
      %p105 = scmp.ne.s32.totalorder %s88, %s104
      %p106 = scmp.eq.s32.totalorder %s28, 0
      %p107 = por %p105, %p106
      %s109 = sadd.s32 %s108, 1
      %p112 = scmp.eq.s32.totalorder %s22, 3
      %p113 = scmp.ne.s32.totalorder %s108, %s110
      %p114 = scmp.eq.s32.totalorder %s22, 0
      %p115 = por %p113, %p114
      %p116 = scmp.ne.s32.totalorder %s108, %s110
      %p117 = scmp.eq.s32.totalorder %s27, 3
      %p118 = por %p116, %p117
      %p119 = scmp.ne.s32.totalorder %s110, %s111
      %p120 = scmp.eq.s32.totalorder %s27, 0
      %p121 = por %p119, %p120
      %p122 = scmp.ne.s32.totalorder %s110, %s111
      %p123 = scmp.eq.s32.totalorder %s28, 3
      %p124 = por %p122, %p123
      %p126 = scmp.ne.s32.totalorder %s111, %s125
      %p127 = scmp.eq.s32.totalorder %s28, 0
      %p128 = por %p126, %p127
      %s130 = sadd.s32 %s129, 1
      %p133 = scmp.eq.s32.totalorder %s22, 3
      %p134 = scmp.ne.s32.totalorder %s129, %s131
      %p135 = scmp.eq.s32.totalorder %s22, 0
      %p136 = por %p134, %p135
      %p137 = scmp.ne.s32.totalorder %s129, %s131
      %p138 = scmp.eq.s32.totalorder %s27, 3
      %p139 = por %p137, %p138
      %p140 = scmp.ne.s32.totalorder %s131, %s132
      %p141 = scmp.eq.s32.totalorder %s27, 0
      %p142 = por %p140, %p141
      %p143 = scmp.ne.s32.totalorder %s131, %s132
      %p144 = scmp.eq.s32.totalorder %s28, 3
      %p145 = por %p143, %p144
      %p147 = scmp.ne.s32.totalorder %s132, %s146
      %p148 = scmp.eq.s32.totalorder %s28, 0
      %p149 = por %p147, %p148
      %s151 = sadd.s32 %s150, 1
      %p154 = scmp.eq.s32.totalorder %s22, 3
      %p155 = scmp.ne.s32.totalorder %s150, %s152
      %p156 = scmp.eq.s32.totalorder %s22, 0
      %p157 = por %p155, %p156
      %p158 = scmp.ne.s32.totalorder %s150, %s152
      %p159 = scmp.eq.s32.totalorder %s27, 3
      %p160 = por %p158, %p159
      %p161 = scmp.ne.s32.totalorder %s152, %s153
      %p162 = scmp.eq.s32.totalorder %s27, 0
      %p163 = por %p161, %p162
      %p164 = scmp.ne.s32.totalorder %s152, %s153
      %p165 = scmp.eq.s32.totalorder %s28, 3
      %p166 = por %p164, %p165
      %p168 = scmp.ne.s32.totalorder %s153, %s167
      %p169 = scmp.eq.s32.totalorder %s28, 0
      %p170 = por %p168, %p169
      %s172 = sadd.s32 %s171, 1
      %p175 = scmp.eq.s32.totalorder %s22, 3
      %p176 = scmp.ne.s32.totalorder %s171, %s173
      %p177 = scmp.eq.s32.totalorder %s22, 0
      %p178 = por %p176, %p177
      %p179 = scmp.ne.s32.totalorder %s171, %s173
      %p180 = scmp.eq.s32.totalorder %s27, 3
      %p181 = por %p179, %p180
      %p182 = scmp.ne.s32.totalorder %s173, %s174
      %p183 = scmp.eq.s32.totalorder %s27, 0
      %p184 = por %p182, %p183
      %p185 = scmp.ne.s32.totalorder %s173, %s174
      %p186 = scmp.eq.s32.totalorder %s28, 3
      %p187 = por %p185, %p186
      %p189 = scmp.ne.s32.totalorder %s174, %s188
      %p190 = scmp.eq.s32.totalorder %s28, 0
      %p191 = por %p189, %p190
      %s193 = sadd.s32 %s192, 1
      %p196 = scmp.eq.s32.totalorder %s22, 3
      %p197 = scmp.ne.s32.totalorder %s192, %s194
      %p198 = scmp.eq.s32.totalorder %s22, 0
      %p199 = por %p197, %p198
      %p200 = scmp.ne.s32.totalorder %s192, %s194
      %p201 = scmp.eq.s32.totalorder %s27, 3
      %p202 = por %p200, %p201
      %p203 = scmp.ne.s32.totalorder %s194, %s195
      %p204 = scmp.eq.s32.totalorder %s27, 0
      %p205 = por %p203, %p204
      %p206 = scmp.ne.s32.totalorder %s194, %s195
      %p207 = scmp.eq.s32.totalorder %s28, 3
      %p208 = por %p206, %p207
      %p210 = scmp.ne.s32.totalorder %s195, %s209
      %p211 = scmp.eq.s32.totalorder %s28, 0
      %p212 = por %p210, %p211
      %s214 = sadd.s32 %s213, 1
      %p217 = scmp.eq.s32.totalorder %s22, 3
      %p218 = scmp.ne.s32.totalorder %s213, %s215
      %p219 = scmp.eq.s32.totalorder %s22, 0
      %p220 = por %p218, %p219
      %p221 = scmp.ne.s32.totalorder %s213, %s215
      %p222 = scmp.eq.s32.totalorder %s27, 3
      %p223 = por %p221, %p222
      %p224 = scmp.ne.s32.totalorder %s215, %s216
      %p225 = scmp.eq.s32.totalorder %s27, 0
      %p226 = por %p224, %p225
      %p227 = scmp.ne.s32.totalorder %s215, %s216
      %p228 = scmp.eq.s32.totalorder %s28, 3
      %p229 = por %p227, %p228
      %p231 = scmp.ne.s32.totalorder %s216, %s230
      %p232 = scmp.eq.s32.totalorder %s28, 0
      %p233 = por %p231, %p232
      %s235 = sadd.s32 %s234, 1
      %p238 = scmp.eq.s32.totalorder %s22, 3
      %p239 = scmp.ne.s32.totalorder %s234, %s236
      %p240 = scmp.eq.s32.totalorder %s22, 0
      %p241 = por %p239, %p240
      %p242 = scmp.ne.s32.totalorder %s234, %s236
      %p243 = scmp.eq.s32.totalorder %s27, 3
      %p244 = por %p242, %p243
      %p245 = scmp.ne.s32.totalorder %s236, %s237
      %p246 = scmp.eq.s32.totalorder %s27, 0
      %p247 = por %p245, %p246
      %p248 = scmp.ne.s32.totalorder %s236, %s237
      %p249 = scmp.eq.s32.totalorder %s28, 3
      %p250 = por %p248, %p249
      %p252 = scmp.ne.s32.totalorder %s237, %s251
      %p253 = scmp.eq.s32.totalorder %s28, 0
      %p254 = por %p252, %p253
      %s256 = sadd.s32 %s255, 1
      %p259 = scmp.eq.s32.totalorder %s22, 3
      %p260 = scmp.ne.s32.totalorder %s255, %s257
      %p261 = scmp.eq.s32.totalorder %s22, 0
      %p262 = por %p260, %p261
      %p263 = scmp.ne.s32.totalorder %s255, %s257
      %p264 = scmp.eq.s32.totalorder %s27, 3
      %p265 = por %p263, %p264
      %p266 = scmp.ne.s32.totalorder %s257, %s258
      %p267 = scmp.eq.s32.totalorder %s27, 0
      %p268 = por %p266, %p267
      %p269 = scmp.ne.s32.totalorder %s257, %s258
      %p270 = scmp.eq.s32.totalorder %s28, 3
      %p271 = por %p269, %p270
      %p273 = scmp.ne.s32.totalorder %s258, %s272
      %p274 = scmp.eq.s32.totalorder %s28, 0
      %p275 = por %p273, %p274
      %s277 = sadd.s32 %s276, 1
      %p280 = scmp.eq.s32.totalorder %s22, 3
      %p281 = scmp.ne.s32.totalorder %s276, %s278
      %p282 = scmp.eq.s32.totalorder %s22, 0
      %p283 = por %p281, %p282
      %p284 = scmp.ne.s32.totalorder %s276, %s278
      %p285 = scmp.eq.s32.totalorder %s27, 3
      %p286 = por %p284, %p285
      %p287 = scmp.ne.s32.totalorder %s278, %s279
      %p288 = scmp.eq.s32.totalorder %s27, 0
      %p289 = por %p287, %p288
      %p290 = scmp.ne.s32.totalorder %s278, %s279
      %p291 = scmp.eq.s32.totalorder %s28, 3
      %p292 = por %p290, %p291
      %p294 = scmp.ne.s32.totalorder %s279, %s293
      %p295 = scmp.eq.s32.totalorder %s28, 0
      %p296 = por %p294, %p295
      %s298 = sadd.s32 %s297, 1
      %p301 = scmp.eq.s32.totalorder %s22, 3
      %p302 = scmp.ne.s32.totalorder %s297, %s299
      %p303 = scmp.eq.s32.totalorder %s22, 0
      %p304 = por %p302, %p303
      %p305 = scmp.ne.s32.totalorder %s297, %s299
      %p306 = scmp.eq.s32.totalorder %s27, 3
      %p307 = por %p305, %p306
      %p308 = scmp.ne.s32.totalorder %s299, %s300
      %p309 = scmp.eq.s32.totalorder %s27, 0
      %p310 = por %p308, %p309
      %p311 = scmp.ne.s32.totalorder %s299, %s300
      %p312 = scmp.eq.s32.totalorder %s28, 3
      %p313 = por %p311, %p312
      %p315 = scmp.ne.s32.totalorder %s300, %s314
      %p316 = scmp.eq.s32.totalorder %s28, 0
      %p317 = por %p315, %p316
      %s318 = ssub.s32 %s22, %s29
      %p319 = scmp.eq.s32.totalorder %s318, 0
      %s321 = sadd.s32 %s320, 1
      %s322 = scalar_select %p319, %s320, %s321
      %p325 = pneg %p319
      %p326 = scmp.eq.s32.totalorder %s22, 3
      %p327 = por %p325, %p326
      %p328 = scmp.ne.s32.totalorder %s320, %s323
      %p329 = scmp.eq.s32.totalorder %s22, 0
      %p330 = por %p328, %p329
      %p331 = scmp.ne.s32.totalorder %s320, %s323
      %p332 = scmp.eq.s32.totalorder %s27, 3
      %p333 = por %p331, %p332
      %p334 = scmp.ne.s32.totalorder %s323, %s324
      %p335 = scmp.eq.s32.totalorder %s27, 0
      %p336 = por %p334, %p335
      %p337 = scmp.ne.s32.totalorder %s323, %s324
      %p338 = scmp.eq.s32.totalorder %s28, 3
      %p339 = por %p337, %p338
      %p341 = scmp.ne.s32.totalorder %s324, %s340
      %p342 = scmp.eq.s32.totalorder %s28, 0
      %p343 = por %p341, %p342
      %p344 = scmp.le.s32.totalorder 1, %s22
      %p345 = scmp.lt.s32.totalorder %s22, 5
      %p346 = pnand %p344, %p345
      %p347 = pneg %p346
      // Predicated region
      $region9: #{gnn_encoder_forward.1} parent=5 // pred_check
        _
      $region10: #{gnn_encoder_forward.1} parent=5 // pred_check_branch
        %349 = sbr.rel (%p346) target = $region12
      $region11: #{gnn_encoder_forward.1} parent=5 // pred_region
        %s350 = ssub.s32 %s22, 1
        // Predicated region
        $region13: #{gnn_encoder_forward.1} parent=11 // pred_check
          %p351 = pneg %p121
        $region14: #{gnn_encoder_forward.1} parent=11 // pred_check_branch
          %353 = sbr.rel (%p351) target = $region16
        $region15: #{gnn_encoder_forward.1} parent=11 // pred_region
          _
        $region16: #{gnn_encoder_forward.1} parent=11 // pred_fallthru
          _
        // Predicated region
        $region17: #{gnn_encoder_forward.1} parent=11 // pred_check
          %p354 = pneg %p142
        $region18: #{gnn_encoder_forward.1} parent=11 // pred_check_branch
          %356 = sbr.rel (%p354) target = $region20
        $region19: #{gnn_encoder_forward.1} parent=11 // pred_region
          _
        $region20: #{gnn_encoder_forward.1} parent=11 // pred_fallthru
          _
        // Predicated region
        $region21: #{gnn_encoder_forward.1} parent=11 // pred_check
          %p357 = pneg %p163
        $region22: #{gnn_encoder_forward.1} parent=11 // pred_check_branch
          %359 = sbr.rel (%p357) target = $region24
        $region23: #{gnn_encoder_forward.1} parent=11 // pred_region
          _
        $region24: #{gnn_encoder_forward.1} parent=11 // pred_fallthru
          _
        // Predicated region
        $region25: #{gnn_encoder_forward.1} parent=11 // pred_check
          %p360 = pneg %p184
        $region26: #{gnn_encoder_forward.1} parent=11 // pred_check_branch
          %362 = sbr.rel (%p360) target = $region28
        $region27: #{gnn_encoder_forward.1} parent=11 // pred_region
          _
        $region28: #{gnn_encoder_forward.1} parent=11 // pred_fallthru
          _
        // Predicated region
        $region29: #{gnn_encoder_forward.1} parent=11 // pred_check
          %p363 = pneg %p205
        $region30: #{gnn_encoder_forward.1} parent=11 // pred_check_branch
          %365 = sbr.rel (%p363) target = $region32
        $region31: #{gnn_encoder_forward.1} parent=11 // pred_region
          _
        $region32: #{gnn_encoder_forward.1} parent=11 // pred_fallthru
          _
        // Predicated region
        $region33: #{gnn_encoder_forward.1} parent=11 // pred_check
          %p366 = pneg %p226
        $region34: #{gnn_encoder_forward.1} parent=11 // pred_check_branch
          %368 = sbr.rel (%p366) target = $region36
        $region35: #{gnn_encoder_forward.1} parent=11 // pred_region
          _
        $region36: #{gnn_encoder_forward.1} parent=11 // pred_fallthru
          _
        // Predicated region
        $region37: #{gnn_encoder_forward.1} parent=11 // pred_check
          %p369 = pneg %p247
        $region38: #{gnn_encoder_forward.1} parent=11 // pred_check_branch
          %371 = sbr.rel (%p369) target = $region40
        $region39: #{gnn_encoder_forward.1} parent=11 // pred_region
          _
        $region40: #{gnn_encoder_forward.1} parent=11 // pred_fallthru
          _
        // Predicated region
        $region41: #{gnn_encoder_forward.1} parent=11 // pred_check
          %p372 = pneg %p268
        $region42: #{gnn_encoder_forward.1} parent=11 // pred_check_branch
          %374 = sbr.rel (%p372) target = $region44
        $region43: #{gnn_encoder_forward.1} parent=11 // pred_region
          _
        $region44: #{gnn_encoder_forward.1} parent=11 // pred_fallthru
          _
        // Predicated region
        $region45: #{gnn_encoder_forward.1} parent=11 // pred_check
          %p375 = pneg %p289
        $region46: #{gnn_encoder_forward.1} parent=11 // pred_check_branch
          %377 = sbr.rel (%p375) target = $region48
        $region47: #{gnn_encoder_forward.1} parent=11 // pred_region
          _
        $region48: #{gnn_encoder_forward.1} parent=11 // pred_fallthru
          _
        // Predicated region
        $region49: #{gnn_encoder_forward.1} parent=11 // pred_check
          %p378 = pneg %p310
        $region50: #{gnn_encoder_forward.1} parent=11 // pred_check_branch
          %380 = sbr.rel (%p378) target = $region52
        $region51: #{gnn_encoder_forward.1} parent=11 // pred_region
          _
        $region52: #{gnn_encoder_forward.1} parent=11 // pred_fallthru
          _
      $region12: #{gnn_encoder_forward.1} parent=5 // pred_fallthru
        _
      %p381 = scmp.lt.s32.totalorder %s22, 4
      // Predicated region
      $region53: #{gnn_encoder_forward.1} parent=5 // pred_check
        %p382 = pneg %p381
      $region54: #{gnn_encoder_forward.1} parent=5 // pred_check_branch
        %384 = sbr.rel (%p382) target = $region56
      $region55: #{gnn_encoder_forward.1} parent=5 // pred_region
        // Predicated region
        $region57: #{gnn_encoder_forward.1} parent=55 // pred_check
          %p385 = pneg %p42
        $region58: #{gnn_encoder_forward.1} parent=55 // pred_check_branch
          %387 = sbr.rel (%p385) target = $region60
        $region59: #{gnn_encoder_forward.1} parent=55 // pred_region
          %p388 = scmp.lt.s32.totalorder %s22, 3
          %s389 = scalar_select %p388, %s22, 3
          %s390 = smul.addr %s389, 2
          %s391 = smul.addr %s390, 8
          %s392 = scalar_lea.vmem %s0, %s391
        $region60: #{gnn_encoder_forward.1} parent=55 // pred_fallthru
          _
        // Predicated region
        $region61: #{gnn_encoder_forward.1} parent=55 // pred_check
          %p393 = pneg %p68
        $region62: #{gnn_encoder_forward.1} parent=55 // pred_check_branch
          %395 = sbr.rel (%p393) target = $region64
        $region63: #{gnn_encoder_forward.1} parent=55 // pred_region
          %p396 = scmp.lt.s32.totalorder %s22, 3
          %s397 = scalar_select %p396, %s22, 3
          %s398 = smul.addr %s397, 4
          %s399 = smul.addr %s398, 8
          %s400 = scalar_lea.vmem %s1, %s399
        $region64: #{gnn_encoder_forward.1} parent=55 // pred_fallthru
          _
        // Predicated region
        $region65: #{gnn_encoder_forward.1} parent=55 // pred_check
          %p401 = pneg %p94
        $region66: #{gnn_encoder_forward.1} parent=55 // pred_check_branch
          %403 = sbr.rel (%p401) target = $region68
        $region67: #{gnn_encoder_forward.1} parent=55 // pred_region
          %p404 = scmp.lt.s32.totalorder %s22, 3
          %s405 = scalar_select %p404, %s22, 3
          %s406 = smul.addr %s405, 4
          %s407 = smul.addr %s406, 8
          %s408 = scalar_lea.vmem %s2, %s407
        $region68: #{gnn_encoder_forward.1} parent=55 // pred_fallthru
          _
      $region56: #{gnn_encoder_forward.1} parent=5 // pred_fallthru
        _
      %p409 = scmp.le.s32.totalorder 1, %s22
      %p410 = scmp.lt.s32.totalorder %s22, 5
      %p411 = pnand %p409, %p410
      %p412 = pneg %p411
      // Predicated region
      $region69: #{gnn_encoder_forward.1} parent=5 // pred_check
        _
      $region70: #{gnn_encoder_forward.1} parent=5 // pred_check_branch
        %414 = sbr.rel (%p411) target = $region72
      $region71: #{gnn_encoder_forward.1} parent=5 // pred_region
        %s415 = ssub.s32 %s22, 1
        %p416 = scmp.lt.s32.totalorder %s27, 3
        %s417 = scalar_select %p416, %s27, 3
        %s418 = smul.addr %s417, 2
        %s419 = smul.addr %s418, 8
        %s420 = scalar_lea.vmem %s0, %s419
        %p421 = pneg %p48
        %p422 = pneg %p45
        %p423 = scmp.lt.s32.totalorder %s27, 3
        %s424 = scalar_select %p423, %s27, 3
        %s425 = smul.addr %s424, 4
        %s426 = smul.addr %s425, 8
        %s427 = scalar_lea.vmem %s1, %s426
        %p428 = pneg %p74
        %p429 = pneg %p71
        %p430 = scmp.lt.s32.totalorder %s27, 3
        %s431 = scalar_select %p430, %s27, 3
        %s432 = smul.addr %s431, 4
        %s433 = smul.addr %s432, 8
        %s434 = scalar_lea.vmem %s2, %s433
        %p435 = pneg %p100
        %p436 = pneg %p97
        %p437 = pneg %p121
        %p438 = pneg %p118
        %p439 = pneg %p142
        %p440 = pneg %p139
        %p441 = pneg %p163
        %p442 = pneg %p160
        %p443 = pneg %p184
        %p444 = pneg %p181
        %p445 = pneg %p205
        %p446 = pneg %p202
        %p447 = pneg %p226
        %p448 = pneg %p223
        %p449 = pneg %p247
        %p450 = pneg %p244
        %p451 = pneg %p268
        %p452 = pneg %p265
        %p453 = pneg %p289
        %p454 = pneg %p286
        %p455 = pneg %p310
        %p456 = pneg %p307
        %p457 = pneg %p336
        %p458 = pneg %p333
        %s459 = sand.u32 %s323, 1
        %s460 = scalar_lea.sflag [#allocation3], %s459
        %s461 = sand.u32 %s323, 1
        %s462 = smul.addr %s461, 16
        %s463 = scalar_lea.vmem [#allocation2], %s462
        %p464 = scmp.lt.s32.totalorder %s27, 3
        %s465 = scalar_select %p464, %s27, 3
        %s466 = smul.addr %s465, 2
        %s467 = smul.addr %s466, 8
        %s468 = scalar_lea.vmem %s0, %s467
        %p469 = scmp.lt.s32.totalorder %s27, 3
        %s470 = scalar_select %p469, %s27, 3
        %s471 = smul.addr %s470, 4
        %s472 = smul.addr %s471, 8
        %s473 = scalar_lea.vmem %s1, %s472
        %p474 = scmp.lt.s32.totalorder %s27, 3
        %s475 = scalar_select %p474, %s27, 3
        %s476 = smul.addr %s475, 4
        %s477 = smul.addr %s476, 8
        %s478 = scalar_lea.vmem %s2, %s477
        %v479 = vlaneseq
        %v480 = vand.u32 %v479, 127
        %vm481 = vcmp.lt.s32.totalorder %v480, 32
        %v482 = vsel %vm481, 1, 0
        %v483 = vcvt.s32.f32 %v482
        %v484 = vld [vmem:[%s468] sm:$0xff]
        %v485 = vld [vmem:[%s468 + $0x8] sm:$0xff]
        %v486 = vld [vmem:[%s473] sm:$0xff]
        %v487 = vld [vmem:[%s473 + $0x8] sm:$0xff]
        %v488 = vld [vmem:[%s473 + $0x10] sm:$0xff]
        %v489 = vld [vmem:[%s473 + $0x18] sm:$0xff]
        %v490 = vld [vmem:[%s478] sm:$0xff]
        %v491 = vld [vmem:[%s478 + $0x8] sm:$0xff]
        %v492 = vld [vmem:[%s478 + $0x10] sm:$0xff]
        %v493 = vld [vmem:[%s478 + $0x18] sm:$0xff]
        %v494 = vld [vmem:[%s3] sm:$0xff]
        %v495 = vld [vmem:[%s3 + $0x8] sm:$0xff]
        %v496 = vld [vmem:[%s3 + $0x10] sm:$0xff]
        %v497 = vld [vmem:[%s3 + $0x18] sm:$0xff]
        %v498 = vld [vmem:[%s3 + $0x20] sm:$0xff]
        %v499 = vld [vmem:[%s3 + $0x28] sm:$0xff]
        %v500 = vld [vmem:[%s3 + $0x30] sm:$0xff]
        %v501 = vld [vmem:[%s3 + $0x38] sm:$0xff]
        %v502 = vld [vmem:[%s3 + $0x40] sm:$0xff]
        %v503 = vld [vmem:[%s3 + $0x48] sm:$0xff]
        %v504 = vld [vmem:[%s3 + $0x50] sm:$0xff]
        %v505 = vld [vmem:[%s3 + $0x58] sm:$0xff]
        %v506 = vld [vmem:[%s3 + $0x60] sm:$0xff]
        %v507 = vld [vmem:[%s3 + $0x68] sm:$0xff]
        %v508 = vld [vmem:[%s3 + $0x70] sm:$0xff]
        %v509 = vld [vmem:[%s3 + $0x78] sm:$0xff]
        %510 = vmatprep.subr.mxu0 0.0
        %511 = vmatpush1.msra.mxu0 %v494
        %512 = vmatprep.subr.mxu0 0.0
        %513 = vmatpush1.msra.mxu0 %v495
        %514 = vmatprep.subr.mxu0 0.0
        %515 = vmatpush1.msra.mxu0 %v496
        %516 = vmatprep.subr.mxu0 0.0
        %517 = vmatpush1.msra.mxu0 %v497
        %518 = vmatprep.subr.mxu0 0.0
        %519 = vmatpush1.msra.mxu0 %v498
        %520 = vmatprep.subr.mxu0 0.0
        %521 = vmatpush1.msra.mxu0 %v499
        %522 = vmatprep.subr.mxu0 0.0
        %523 = vmatpush1.msra.mxu0 %v500
        %524 = vmatprep.subr.mxu0 0.0
        %525 = vmatpush1.msra.mxu0 %v501
        %526 = vmatprep.subr.mxu0 0.0
        %527 = vmatpush1.msra.mxu0 %v502
        %528 = vmatprep.subr.mxu0 0.0
        %529 = vmatpush1.msra.mxu0 %v503
        %530 = vmatprep.subr.mxu0 0.0
        %531 = vmatpush1.msra.mxu0 %v504
        %532 = vmatprep.subr.mxu0 0.0
        %533 = vmatpush1.msra.mxu0 %v505
        %534 = vmatprep.subr.mxu0 0.0
        %535 = vmatpush1.msra.mxu0 %v506
        %536 = vmatprep.subr.mxu0 0.0
        %537 = vmatpush1.msra.mxu0 %v507
        %538 = vmatprep.subr.mxu0 0.0
        %539 = vmatpush1.msra.mxu0 %v508
        %540 = vmatprep.subr.mxu0 0.0
        %541 = vmatpush1.msra.mxu0 %v509
        %542 = vmatprep.subr.mxu0 0.0
        %543 = vmatpush1.msra.mxu0 0.0
        %544 = vmatprep.subr.mxu0 0.0
        %545 = vmatpush1.msra.mxu0 0.0
        %546 = vmatprep.subr.mxu0 0.0
        %547 = vmatpush1.msra.mxu0 0.0
        %548 = vmatprep.subr.mxu0 0.0
        %549 = vmatpush1.msra.mxu0 0.0
        %550 = vmatprep.subr.mxu0 0.0
        %551 = vmatpush1.msra.mxu0 0.0
        %552 = vmatprep.subr.mxu0 0.0
        %553 = vmatpush1.msra.mxu0 0.0
        %554 = vmatprep.subr.mxu0 0.0
        %555 = vmatpush1.msra.mxu0 0.0
        %556 = vmatprep.subr.mxu0 0.0
        %557 = vmatpush1.msra.mxu0 0.0
        %558 = vmatprep.subr.mxu0 0.0
        %559 = vmatpush1.msra.mxu0 0.0
        %560 = vmatprep.subr.mxu0 0.0
        %561 = vmatpush1.msra.mxu0 0.0
        %562 = vmatprep.subr.mxu0 0.0
        %563 = vmatpush1.msra.mxu0 0.0
        %564 = vmatprep.subr.mxu0 0.0
        %565 = vmatpush1.msra.mxu0 0.0
        %566 = vmatprep.subr.mxu0 0.0
        %567 = vmatpush1.msra.mxu0 0.0
        %568 = vmatprep.subr.mxu0 0.0
        %569 = vmatpush1.msra.mxu0 0.0
        %570 = vmatprep.subr.mxu0 0.0
        %571 = vmatpush1.msra.mxu0 0.0
        %572 = vmatprep.subr.mxu0 0.0
        %573 = vmatpush1.msra.mxu0 0.0
        %574 = vmatprep.mubr.f32.mxu0 0.0
        %575 = vmatmul.mubr.f32.gmra.mrb[0].mxu0 %v484
        %v576 = vpop.f32.mrb[0].mxu0
        %v577 = vadd.f32 0.0, %v576
        %v578 = vpop.f32.mrb[0].mxu0
        %579 = vmatprep.mubr.f32.mxu0 0.0
        %580 = vmatmul.mubr.f32.gmra.mrb[0].mxu0 %v485
        %v581 = vpop.f32.mrb[0].mxu0
        %v582 = vadd.f32 0.0, %v581
        %v583 = vpop.f32.mrb[0].mxu0
        %584 = vdwg.mxu0
        %v585 = vmax.f32 %v577, 0.0
        %v586 = vmax.f32 %v582, 0.0
        %v587 = vld [vmem:[%s4] sm:$0xff]
        %v588 = vld [vmem:[%s4 + $0x8] sm:$0xff]
        %v589 = vld [vmem:[%s4 + $0x10] sm:$0xff]
        %v590 = vld [vmem:[%s4 + $0x18] sm:$0xff]
        %v591 = vld [vmem:[%s4 + $0x20] sm:$0xff]
        %v592 = vld [vmem:[%s4 + $0x28] sm:$0xff]
        %v593 = vld [vmem:[%s4 + $0x30] sm:$0xff]
        %v594 = vld [vmem:[%s4 + $0x38] sm:$0xff]
        %v595 = vld [vmem:[%s4 + $0x40] sm:$0xff]
        %v596 = vld [vmem:[%s4 + $0x48] sm:$0xff]
        %v597 = vld [vmem:[%s4 + $0x50] sm:$0xff]
        %v598 = vld [vmem:[%s4 + $0x58] sm:$0xff]
        %v599 = vld [vmem:[%s4 + $0x60] sm:$0xff]
        %v600 = vld [vmem:[%s4 + $0x68] sm:$0xff]
        %v601 = vld [vmem:[%s4 + $0x70] sm:$0xff]
        %v602 = vld [vmem:[%s4 + $0x78] sm:$0xff]
        %603 = vmatprep.subr.mxu0 0.0
        %604 = vmatpush1.msra.mxu0 %v587
        %605 = vmatprep.subr.mxu0 0.0
        %606 = vmatpush1.msra.mxu0 %v588
        %607 = vmatprep.subr.mxu0 0.0
        %608 = vmatpush1.msra.mxu0 %v589
        %609 = vmatprep.subr.mxu0 0.0
        %610 = vmatpush1.msra.mxu0 %v590
        %611 = vmatprep.subr.mxu0 0.0
        %612 = vmatpush1.msra.mxu0 %v591
        %613 = vmatprep.subr.mxu0 0.0
        %614 = vmatpush1.msra.mxu0 %v592
        %615 = vmatprep.subr.mxu0 0.0
        %616 = vmatpush1.msra.mxu0 %v593
        %617 = vmatprep.subr.mxu0 0.0
        %618 = vmatpush1.msra.mxu0 %v594
        %619 = vmatprep.subr.mxu0 0.0
        %620 = vmatpush1.msra.mxu0 %v595
        %621 = vmatprep.subr.mxu0 0.0
        %622 = vmatpush1.msra.mxu0 %v596
        %623 = vmatprep.subr.mxu0 0.0
        %624 = vmatpush1.msra.mxu0 %v597
        %625 = vmatprep.subr.mxu0 0.0
        %626 = vmatpush1.msra.mxu0 %v598
        %627 = vmatprep.subr.mxu0 0.0
        %628 = vmatpush1.msra.mxu0 %v599
        %629 = vmatprep.subr.mxu0 0.0
        %630 = vmatpush1.msra.mxu0 %v600
        %631 = vmatprep.subr.mxu0 0.0
        %632 = vmatpush1.msra.mxu0 %v601
        %633 = vmatprep.subr.mxu0 0.0
        %634 = vmatpush1.msra.mxu0 %v602
        %635 = vmatprep.subr.mxu0 0.0
        %636 = vmatpush1.msra.mxu0 0.0
        %637 = vmatprep.subr.mxu0 0.0
        %638 = vmatpush1.msra.mxu0 0.0
        %639 = vmatprep.subr.mxu0 0.0
        %640 = vmatpush1.msra.mxu0 0.0
        %641 = vmatprep.subr.mxu0 0.0
        %642 = vmatpush1.msra.mxu0 0.0
        %643 = vmatprep.subr.mxu0 0.0
        %644 = vmatpush1.msra.mxu0 0.0
        %645 = vmatprep.subr.mxu0 0.0
        %646 = vmatpush1.msra.mxu0 0.0
        %647 = vmatprep.subr.mxu0 0.0
        %648 = vmatpush1.msra.mxu0 0.0
        %649 = vmatprep.subr.mxu0 0.0
        %650 = vmatpush1.msra.mxu0 0.0
        %651 = vmatprep.subr.mxu0 0.0
        %652 = vmatpush1.msra.mxu0 0.0
        %653 = vmatprep.subr.mxu0 0.0
        %654 = vmatpush1.msra.mxu0 0.0
        %655 = vmatprep.subr.mxu0 0.0
        %656 = vmatpush1.msra.mxu0 0.0
        %657 = vmatprep.subr.mxu0 0.0
        %658 = vmatpush1.msra.mxu0 0.0
        %659 = vmatprep.subr.mxu0 0.0
        %660 = vmatpush1.msra.mxu0 0.0
        %661 = vmatprep.subr.mxu0 0.0
        %662 = vmatpush1.msra.mxu0 0.0
        %663 = vmatprep.subr.mxu0 0.0
        %664 = vmatpush1.msra.mxu0 0.0
        %665 = vmatprep.subr.mxu0 0.0
        %666 = vmatpush1.msra.mxu0 0.0
        %667 = vmatprep.mubr.f32.mxu0 0.0
        %668 = vmatmul.mubr.f32.gmra.mrb[0].mxu0 %v585
        %v669 = vpop.f32.mrb[0].mxu0
        %v670 = vadd.f32 0.0, %v669
        %v671 = vpop.f32.mrb[0].mxu0
        %672 = vmatprep.mubr.f32.mxu0 0.0
        %673 = vmatmul.mubr.f32.gmra.mrb[0].mxu0 %v586
        %v674 = vpop.f32.mrb[0].mxu0
        %v675 = vadd.f32 0.0, %v674
        %v676 = vpop.f32.mrb[0].mxu0
        %677 = vdwg.mxu0
        %vm678 = vcmask 130048
        %v680 = vsel %vm678, %v486, 0
        %v683 = vsel %vm678, %v487, 0
        %685 = vmatprep.subr.mxu0 0.0
        %686 = vmatpush1.msra.mxu0 %v670
        %687 = vmatprep.subr.mxu0 0.0
        %688 = vmatpush1.msra.mxu0 %v675
        %689 = vmatprep.subr.mxu0 0.0
        %690 = vmatpush1.msra.mxu0 0.0
        %691 = vmatprep.subr.mxu0 0.0
        %692 = vmatpush1.msra.mxu0 0.0
        %693 = vmatprep.subr.mxu0 0.0
        %694 = vmatpush1.msra.mxu0 0.0
        %695 = vmatprep.subr.mxu0 0.0
        %696 = vmatpush1.msra.mxu0 0.0
        %697 = vmatprep.subr.mxu0 0.0
        %698 = vmatpush1.msra.mxu0 0.0
        %699 = vmatprep.subr.mxu0 0.0
        %700 = vmatpush1.msra.mxu0 0.0
        %701 = vmatprep.subr.mxu0 0.0
        %702 = vmatpush1.msra.mxu0 0.0
        %703 = vmatprep.subr.mxu0 0.0
        %704 = vmatpush1.msra.mxu0 0.0
        %705 = vmatprep.subr.mxu0 0.0
        %706 = vmatpush1.msra.mxu0 0.0
        %707 = vmatprep.subr.mxu0 0.0
        %708 = vmatpush1.msra.mxu0 0.0
        %709 = vmatprep.subr.mxu0 0.0
        %710 = vmatpush1.msra.mxu0 0.0
        %711 = vmatprep.subr.mxu0 0.0
        %712 = vmatpush1.msra.mxu0 0.0
        %713 = vmatprep.subr.mxu0 0.0
        %714 = vmatpush1.msra.mxu0 0.0
        %715 = vmatprep.subr.mxu0 0.0
        %716 = vmatpush1.msra.mxu0 0.0
        %717 = vmatprep.subr.mxu0 0.0
        %718 = vmatpush1.msra.mxu0 0.0
        %719 = vmatprep.subr.mxu0 0.0
        %720 = vmatpush1.msra.mxu0 0.0
        %721 = vmatprep.subr.mxu0 0.0
        %722 = vmatpush1.msra.mxu0 0.0
        %723 = vmatprep.subr.mxu0 0.0
        %724 = vmatpush1.msra.mxu0 0.0
        %725 = vmatprep.subr.mxu0 0.0
        %726 = vmatpush1.msra.mxu0 0.0
        %727 = vmatprep.subr.mxu0 0.0
        %728 = vmatpush1.msra.mxu0 0.0
        %729 = vmatprep.subr.mxu0 0.0
        %730 = vmatpush1.msra.mxu0 0.0
        %731 = vmatprep.subr.mxu0 0.0
        %732 = vmatpush1.msra.mxu0 0.0
        %733 = vmatprep.subr.mxu0 0.0
        %734 = vmatpush1.msra.mxu0 0.0
        %735 = vmatprep.subr.mxu0 0.0
        %736 = vmatpush1.msra.mxu0 0.0
        %737 = vmatprep.subr.mxu0 0.0
        %738 = vmatpush1.msra.mxu0 0.0
        %739 = vmatprep.subr.mxu0 0.0
        %740 = vmatpush1.msra.mxu0 0.0
        %741 = vmatprep.subr.mxu0 0.0
        %742 = vmatpush1.msra.mxu0 0.0
        %743 = vmatprep.subr.mxu0 0.0
        %744 = vmatpush1.msra.mxu0 0.0
        %745 = vmatprep.subr.mxu0 0.0
        %746 = vmatpush1.msra.mxu0 0.0
        %747 = vmatprep.subr.mxu0 0.0
        %748 = vmatpush1.msra.mxu0 0.0
        %749 = vmatprep.mubr.f32.mxu0 0.0
        %750 = vmatmul.mubr.f32.gmra.mrb[0].mxu0 %v680
        %v751 = vpop.f32.mrb[0].mxu0
        %v752 = vadd.f32 0.0, %v751
        %v753 = vpop.f32.mrb[0].mxu0
        %754 = vmatprep.mubr.f32.mxu0 0.0
        %755 = vmatmul.mubr.f32.gmra.mrb[0].mxu0 %v683
        %v756 = vpop.f32.mrb[0].mxu0
        %v757 = vadd.f32 0.0, %v756
        %v758 = vpop.f32.mrb[0].mxu0
        %759 = vdwg.mxu0
        %vm760 = vcmp.gt.f32.partialorder %v490, 0.0
        %vm761 = vcmp.gt.f32.partialorder %v491, 0.0
        %v762 = vsel %vm760, 1, 0
        %v763 = vsel %vm761, 1, 0
        %764 = vset.pattern.permute.xlu0 0
        %765 = vperm.xlu0 %764, %v762
        %v766 = vpop.permute.xlu0 %765
        %767 = vset.pattern.permute.xlu0 0
        %768 = vperm.xlu0 %767, %v763
        %v769 = vpop.permute.xlu0 %768
        %vm770 = vcmp.eq.s32.totalorder %v766, 1
        %vm771 = vcmp.eq.s32.totalorder %v769, 1
        %v772 = vsel %vm770, %v752, %v484
        %v773 = vsel %vm771, %v757, %v485
        %s774 = scalar_lea.vmem %s3, 128
        %v775 = vld [vmem:[%s774] sm:$0xff]
        %v776 = vld [vmem:[%s774 + $0x8] sm:$0xff]
        %v777 = vld [vmem:[%s774 + $0x10] sm:$0xff]
        %v778 = vld [vmem:[%s774 + $0x18] sm:$0xff]
        %v779 = vld [vmem:[%s774 + $0x20] sm:$0xff]
        %v780 = vld [vmem:[%s774 + $0x28] sm:$0xff]
        %v781 = vld [vmem:[%s774 + $0x30] sm:$0xff]
        %v782 = vld [vmem:[%s774 + $0x38] sm:$0xff]
        %v783 = vld [vmem:[%s774 + $0x40] sm:$0xff]
        %v784 = vld [vmem:[%s774 + $0x48] sm:$0xff]
        %v785 = vld [vmem:[%s774 + $0x50] sm:$0xff]
        %v786 = vld [vmem:[%s774 + $0x58] sm:$0xff]
        %v787 = vld [vmem:[%s774 + $0x60] sm:$0xff]
        %v788 = vld [vmem:[%s774 + $0x68] sm:$0xff]
        %v789 = vld [vmem:[%s774 + $0x70] sm:$0xff]
        %v790 = vld [vmem:[%s774 + $0x78] sm:$0xff]
        %791 = vmatprep.subr.mxu0 0.0
        %792 = vmatpush1.msra.mxu0 %v775
        %793 = vmatprep.subr.mxu0 0.0
        %794 = vmatpush1.msra.mxu0 %v776
        %795 = vmatprep.subr.mxu0 0.0
        %796 = vmatpush1.msra.mxu0 %v777
        %797 = vmatprep.subr.mxu0 0.0
        %798 = vmatpush1.msra.mxu0 %v778
        %799 = vmatprep.subr.mxu0 0.0
        %800 = vmatpush1.msra.mxu0 %v779
        %801 = vmatprep.subr.mxu0 0.0
        %802 = vmatpush1.msra.mxu0 %v780
        %803 = vmatprep.subr.mxu0 0.0
        %804 = vmatpush1.msra.mxu0 %v781
        %805 = vmatprep.subr.mxu0 0.0
        %806 = vmatpush1.msra.mxu0 %v782
        %807 = vmatprep.subr.mxu0 0.0
        %808 = vmatpush1.msra.mxu0 %v783
        %809 = vmatprep.subr.mxu0 0.0
        %810 = vmatpush1.msra.mxu0 %v784
        %811 = vmatprep.subr.mxu0 0.0
        %812 = vmatpush1.msra.mxu0 %v785
        %813 = vmatprep.subr.mxu0 0.0
        %814 = vmatpush1.msra.mxu0 %v786
        %815 = vmatprep.subr.mxu0 0.0
        %816 = vmatpush1.msra.mxu0 %v787
        %817 = vmatprep.subr.mxu0 0.0
        %818 = vmatpush1.msra.mxu0 %v788
        %819 = vmatprep.subr.mxu0 0.0
        %820 = vmatpush1.msra.mxu0 %v789
        %821 = vmatprep.subr.mxu0 0.0
        %822 = vmatpush1.msra.mxu0 %v790
        %823 = vmatprep.subr.mxu0 0.0
        %824 = vmatpush1.msra.mxu0 0.0
        %825 = vmatprep.subr.mxu0 0.0
        %826 = vmatpush1.msra.mxu0 0.0
        %827 = vmatprep.subr.mxu0 0.0
        %828 = vmatpush1.msra.mxu0 0.0
        %829 = vmatprep.subr.mxu0 0.0
        %830 = vmatpush1.msra.mxu0 0.0
        %831 = vmatprep.subr.mxu0 0.0
        %832 = vmatpush1.msra.mxu0 0.0
        %833 = vmatprep.subr.mxu0 0.0
        %834 = vmatpush1.msra.mxu0 0.0
        %835 = vmatprep.subr.mxu0 0.0
        %836 = vmatpush1.msra.mxu0 0.0
        %837 = vmatprep.subr.mxu0 0.0
        %838 = vmatpush1.msra.mxu0 0.0
        %839 = vmatprep.subr.mxu0 0.0
        %840 = vmatpush1.msra.mxu0 0.0
        %841 = vmatprep.subr.mxu0 0.0
        %842 = vmatpush1.msra.mxu0 0.0
        %843 = vmatprep.subr.mxu0 0.0
        %844 = vmatpush1.msra.mxu0 0.0
        %845 = vmatprep.subr.mxu0 0.0
        %846 = vmatpush1.msra.mxu0 0.0
        %847 = vmatprep.subr.mxu0 0.0
        %848 = vmatpush1.msra.mxu0 0.0
        %849 = vmatprep.subr.mxu0 0.0
        %850 = vmatpush1.msra.mxu0 0.0
        %851 = vmatprep.subr.mxu0 0.0
        %852 = vmatpush1.msra.mxu0 0.0
        %853 = vmatprep.subr.mxu0 0.0
        %854 = vmatpush1.msra.mxu0 0.0
        %855 = vmatprep.mubr.f32.mxu0 0.0
        %856 = vmatmul.mubr.f32.gmra.mrb[0].mxu0 %v772
        %v857 = vpop.f32.mrb[0].mxu0
        %v858 = vadd.f32 0.0, %v857
        %v859 = vpop.f32.mrb[0].mxu0
        %860 = vmatprep.mubr.f32.mxu0 0.0
        %861 = vmatmul.mubr.f32.gmra.mrb[0].mxu0 %v773
        %v862 = vpop.f32.mrb[0].mxu0
        %v863 = vadd.f32 0.0, %v862
        %v864 = vpop.f32.mrb[0].mxu0
        %865 = vdwg.mxu0
        %v866 = vmax.f32 %v858, 0.0
        %v867 = vmax.f32 %v863, 0.0
        %s868 = scalar_lea.vmem %s4, 128
        %v869 = vld [vmem:[%s868] sm:$0xff]
        %v870 = vld [vmem:[%s868 + $0x8] sm:$0xff]
        %v871 = vld [vmem:[%s868 + $0x10] sm:$0xff]
        %v872 = vld [vmem:[%s868 + $0x18] sm:$0xff]
        %v873 = vld [vmem:[%s868 + $0x20] sm:$0xff]
        %v874 = vld [vmem:[%s868 + $0x28] sm:$0xff]
        %v875 = vld [vmem:[%s868 + $0x30] sm:$0xff]
        %v876 = vld [vmem:[%s868 + $0x38] sm:$0xff]
        %v877 = vld [vmem:[%s868 + $0x40] sm:$0xff]
        %v878 = vld [vmem:[%s868 + $0x48] sm:$0xff]
        %v879 = vld [vmem:[%s868 + $0x50] sm:$0xff]
        %v880 = vld [vmem:[%s868 + $0x58] sm:$0xff]
        %v881 = vld [vmem:[%s868 + $0x60] sm:$0xff]
        %v882 = vld [vmem:[%s868 + $0x68] sm:$0xff]
        %v883 = vld [vmem:[%s868 + $0x70] sm:$0xff]
        %v884 = vld [vmem:[%s868 + $0x78] sm:$0xff]
        %885 = vmatprep.subr.mxu0 0.0
        %886 = vmatpush1.msra.mxu0 %v869
        %887 = vmatprep.subr.mxu0 0.0
        %888 = vmatpush1.msra.mxu0 %v870
        %889 = vmatprep.subr.mxu0 0.0
        %890 = vmatpush1.msra.mxu0 %v871
        %891 = vmatprep.subr.mxu0 0.0
        %892 = vmatpush1.msra.mxu0 %v872
        %893 = vmatprep.subr.mxu0 0.0
        %894 = vmatpush1.msra.mxu0 %v873
        %895 = vmatprep.subr.mxu0 0.0
        %896 = vmatpush1.msra.mxu0 %v874
        %897 = vmatprep.subr.mxu0 0.0
        %898 = vmatpush1.msra.mxu0 %v875
        %899 = vmatprep.subr.mxu0 0.0
        %900 = vmatpush1.msra.mxu0 %v876
        %901 = vmatprep.subr.mxu0 0.0
        %902 = vmatpush1.msra.mxu0 %v877
        %903 = vmatprep.subr.mxu0 0.0
        %904 = vmatpush1.msra.mxu0 %v878
        %905 = vmatprep.subr.mxu0 0.0
        %906 = vmatpush1.msra.mxu0 %v879
        %907 = vmatprep.subr.mxu0 0.0
        %908 = vmatpush1.msra.mxu0 %v880
        %909 = vmatprep.subr.mxu0 0.0
        %910 = vmatpush1.msra.mxu0 %v881
        %911 = vmatprep.subr.mxu0 0.0
        %912 = vmatpush1.msra.mxu0 %v882
        %913 = vmatprep.subr.mxu0 0.0
        %914 = vmatpush1.msra.mxu0 %v883
        %915 = vmatprep.subr.mxu0 0.0
        %916 = vmatpush1.msra.mxu0 %v884
        %917 = vmatprep.subr.mxu0 0.0
        %918 = vmatpush1.msra.mxu0 0.0
        %919 = vmatprep.subr.mxu0 0.0
        %920 = vmatpush1.msra.mxu0 0.0
        %921 = vmatprep.subr.mxu0 0.0
        %922 = vmatpush1.msra.mxu0 0.0
        %923 = vmatprep.subr.mxu0 0.0
        %924 = vmatpush1.msra.mxu0 0.0
        %925 = vmatprep.subr.mxu0 0.0
        %926 = vmatpush1.msra.mxu0 0.0
        %927 = vmatprep.subr.mxu0 0.0
        %928 = vmatpush1.msra.mxu0 0.0
        %929 = vmatprep.subr.mxu0 0.0
        %930 = vmatpush1.msra.mxu0 0.0
        %931 = vmatprep.subr.mxu0 0.0
        %932 = vmatpush1.msra.mxu0 0.0
        %933 = vmatprep.subr.mxu0 0.0
        %934 = vmatpush1.msra.mxu0 0.0
        %935 = vmatprep.subr.mxu0 0.0
        %936 = vmatpush1.msra.mxu0 0.0
        %937 = vmatprep.subr.mxu0 0.0
        %938 = vmatpush1.msra.mxu0 0.0
        %939 = vmatprep.subr.mxu0 0.0
        %940 = vmatpush1.msra.mxu0 0.0
        %941 = vmatprep.subr.mxu0 0.0
        %942 = vmatpush1.msra.mxu0 0.0
        %943 = vmatprep.subr.mxu0 0.0
        %944 = vmatpush1.msra.mxu0 0.0
        %945 = vmatprep.subr.mxu0 0.0
        %946 = vmatpush1.msra.mxu0 0.0
        %947 = vmatprep.subr.mxu0 0.0
        %948 = vmatpush1.msra.mxu0 0.0
        %949 = vmatprep.mubr.f32.mxu0 0.0
        %950 = vmatmul.mubr.f32.gmra.mrb[0].mxu0 %v866
        %v951 = vpop.f32.mrb[0].mxu0
        %v952 = vadd.f32 0.0, %v951
        %v953 = vpop.f32.mrb[0].mxu0
        %954 = vmatprep.mubr.f32.mxu0 0.0
        %955 = vmatmul.mubr.f32.gmra.mrb[0].mxu0 %v867
        %v956 = vpop.f32.mrb[0].mxu0
        %v957 = vadd.f32 0.0, %v956
        %v958 = vpop.f32.mrb[0].mxu0
        %959 = vdwg.mxu0
        %v961 = vsel %vm678, %v488, 0
        %v964 = vsel %vm678, %v489, 0
        %966 = vmatprep.subr.mxu0 0.0
        %967 = vmatpush1.msra.mxu0 %v952
        %968 = vmatprep.subr.mxu0 0.0
        %969 = vmatpush1.msra.mxu0 %v957
        %970 = vmatprep.subr.mxu0 0.0
        %971 = vmatpush1.msra.mxu0 0.0
        %972 = vmatprep.subr.mxu0 0.0
        %973 = vmatpush1.msra.mxu0 0.0
        %974 = vmatprep.subr.mxu0 0.0
        %975 = vmatpush1.msra.mxu0 0.0
        %976 = vmatprep.subr.mxu0 0.0
        %977 = vmatpush1.msra.mxu0 0.0
        %978 = vmatprep.subr.mxu0 0.0
        %979 = vmatpush1.msra.mxu0 0.0
        %980 = vmatprep.subr.mxu0 0.0
        %981 = vmatpush1.msra.mxu0 0.0
        %982 = vmatprep.subr.mxu0 0.0
        %983 = vmatpush1.msra.mxu0 0.0
        %984 = vmatprep.subr.mxu0 0.0
        %985 = vmatpush1.msra.mxu0 0.0
        %986 = vmatprep.subr.mxu0 0.0
        %987 = vmatpush1.msra.mxu0 0.0
        %988 = vmatprep.subr.mxu0 0.0
        %989 = vmatpush1.msra.mxu0 0.0
        %990 = vmatprep.subr.mxu0 0.0
        %991 = vmatpush1.msra.mxu0 0.0
        %992 = vmatprep.subr.mxu0 0.0
        %993 = vmatpush1.msra.mxu0 0.0
        %994 = vmatprep.subr.mxu0 0.0
        %995 = vmatpush1.msra.mxu0 0.0
        %996 = vmatprep.subr.mxu0 0.0
        %997 = vmatpush1.msra.mxu0 0.0
        %998 = vmatprep.subr.mxu0 0.0
        %999 = vmatpush1.msra.mxu0 0.0
        %1000 = vmatprep.subr.mxu0 0.0
        %1001 = vmatpush1.msra.mxu0 0.0
        %1002 = vmatprep.subr.mxu0 0.0
        %1003 = vmatpush1.msra.mxu0 0.0
        %1004 = vmatprep.subr.mxu0 0.0
        %1005 = vmatpush1.msra.mxu0 0.0
        %1006 = vmatprep.subr.mxu0 0.0
        %1007 = vmatpush1.msra.mxu0 0.0
        %1008 = vmatprep.subr.mxu0 0.0
        %1009 = vmatpush1.msra.mxu0 0.0
        %1010 = vmatprep.subr.mxu0 0.0
        %1011 = vmatpush1.msra.mxu0 0.0
        %1012 = vmatprep.subr.mxu0 0.0
        %1013 = vmatpush1.msra.mxu0 0.0
        %1014 = vmatprep.subr.mxu0 0.0
        %1015 = vmatpush1.msra.mxu0 0.0
        %1016 = vmatprep.subr.mxu0 0.0
        %1017 = vmatpush1.msra.mxu0 0.0
        %1018 = vmatprep.subr.mxu0 0.0
        %1019 = vmatpush1.msra.mxu0 0.0
        %1020 = vmatprep.subr.mxu0 0.0
        %1021 = vmatpush1.msra.mxu0 0.0
        %1022 = vmatprep.subr.mxu0 0.0
        %1023 = vmatpush1.msra.mxu0 0.0
        %1024 = vmatprep.subr.mxu0 0.0
        %1025 = vmatpush1.msra.mxu0 0.0
        %1026 = vmatprep.subr.mxu0 0.0
        %1027 = vmatpush1.msra.mxu0 0.0
        %1028 = vmatprep.subr.mxu0 0.0
        %1029 = vmatpush1.msra.mxu0 0.0
        %1030 = vmatprep.mubr.f32.mxu0 0.0
        %1031 = vmatmul.mubr.f32.gmra.mrb[0].mxu0 %v961
        %v1032 = vpop.f32.mrb[0].mxu0
        %v1033 = vadd.f32 0.0, %v1032
        %v1034 = vpop.f32.mrb[0].mxu0
        %1035 = vmatprep.mubr.f32.mxu0 0.0
        %1036 = vmatmul.mubr.f32.gmra.mrb[0].mxu0 %v964
        %v1037 = vpop.f32.mrb[0].mxu0
        %v1038 = vadd.f32 0.0, %v1037
        %v1039 = vpop.f32.mrb[0].mxu0
        %1040 = vdwg.mxu0
        %vm1041 = vcmp.gt.f32.partialorder %v492, 0.0
        %vm1042 = vcmp.gt.f32.partialorder %v493, 0.0
        %v1043 = vsel %vm1041, 1, 0
        %v1044 = vsel %vm1042, 1, 0
        %1045 = vset.pattern.permute.xlu0 0
        %1046 = vperm.xlu0 %1045, %v1043
        %v1047 = vpop.permute.xlu0 %1046
        %1048 = vset.pattern.permute.xlu0 0
        %1049 = vperm.xlu0 %1048, %v1044
        %v1050 = vpop.permute.xlu0 %1049
        %vm1051 = vcmp.eq.s32.totalorder %v1047, 1
        %vm1052 = vcmp.eq.s32.totalorder %v1050, 1
        %v1053 = vsel %vm1051, %v1033, %v772
        %v1054 = vsel %vm1052, %v1038, %v773
        %v1055 = vld [vmem:[%s7] sm:$0x1]
        %v1056 = vld [vmem:[%s8] sm:$0x1]
        %1057 = vadd.xlane.f32.xlu0 %v1053
        %v1058 = vpop.xlane.xlu0 %1057
        %1059 = vadd.xlane.f32.xlu0 %v1054
        %v1060 = vpop.xlane.xlu0 %1059
        %v1061 = vmul.f32 %v1058, 0.03125
        %v1062 = vmul.f32 %v1060, 0.03125
        %v1063 = vsub.f32 %v1053, %v1061
        %v1064 = vsub.f32 %v1054, %v1062
        %v1065 = vmul.f32 %v1063, %v483
        %v1066 = vmul.f32 %v1064, %v483
        %v1067 = vmul.f32 %v1065, %v1065
        %v1068 = vmul.f32 %v1066, %v1066
        %1069 = vadd.xlane.f32.xlu0 %v1067
        %v1070 = vpop.xlane.xlu0 %1069
        %1071 = vadd.xlane.f32.xlu0 %v1068
        %v1072 = vpop.xlane.xlu0 %1071
        %v1073 = vmul.f32 %v1070, 0.03125
        %v1074 = vmul.f32 %v1072, 0.03125
        %v1075 = vadd.f32 %v1073, 1e-05
        %v1076 = vadd.f32 %v1074, 1e-05
        %v1077 = vrsqrt.pop %v1075
        %v1078 = vrsqrt.pop %v1076
        %v1079 = vmul.f32 %v1065, %v1077
        %v1080 = vmul.f32 %v1066, %v1078
        %v1082 = vlaneseq
        %v1083 = vshrl.u32 %v1082, 7
        %v1084 = vsub.s32 0, %v1083
        %v1085 = vrot.slane %v1055, %v1084
        %v1087 = vmul.f32 %v1079, %v1085
        %v1088 = vmul.f32 %v1080, %v1085
        %v1090 = vlaneseq
        %v1091 = vshrl.u32 %v1090, 7
        %v1092 = vsub.s32 0, %v1091
        %v1093 = vrot.slane %v1056, %v1092
        %v1095 = vadd.f32 %v1087, %v1093
        %v1096 = vadd.f32 %v1088, %v1093
        %v1097 = vld [vmem:[%s9] sm:$0xff]
        %v1098 = vld [vmem:[%s9 + $0x8] sm:$0xff]
        %v1099 = vld [vmem:[%s9 + $0x10] sm:$0xff]
        %v1100 = vld [vmem:[%s9 + $0x18] sm:$0xff]
        %v1101 = vld [vmem:[%s9 + $0x20] sm:$0xff]
        %v1102 = vld [vmem:[%s9 + $0x28] sm:$0xff]
        %v1103 = vld [vmem:[%s9 + $0x30] sm:$0xff]
        %v1104 = vld [vmem:[%s9 + $0x38] sm:$0xff]
        %v1105 = vld [vmem:[%s9 + $0x40] sm:$0xff]
        %v1106 = vld [vmem:[%s9 + $0x48] sm:$0xff]
        %v1107 = vld [vmem:[%s9 + $0x50] sm:$0xff]
        %v1108 = vld [vmem:[%s9 + $0x58] sm:$0xff]
        %v1109 = vld [vmem:[%s9 + $0x60] sm:$0xff]
        %v1110 = vld [vmem:[%s9 + $0x68] sm:$0xff]
        %v1111 = vld [vmem:[%s9 + $0x70] sm:$0xff]
        %v1112 = vld [vmem:[%s9 + $0x78] sm:$0xff]
        %v1113 = vld [vmem:[%s10] sm:$0x1]
        %v1115 = vlaneseq
        %v1116 = vshrl.u32 %v1115, 7
        %v1117 = vsub.s32 0, %v1116
        %v1118 = vrot.slane %v1113, %v1117
        %1120 = vmatprep.subr.mxu0 0.0
        %1121 = vmatpush1.msra.mxu0 %v1097
        %1122 = vmatprep.subr.mxu0 0.0
        %1123 = vmatpush1.msra.mxu0 %v1098
        %1124 = vmatprep.subr.mxu0 0.0
        %1125 = vmatpush1.msra.mxu0 %v1099
        %1126 = vmatprep.subr.mxu0 0.0
        %1127 = vmatpush1.msra.mxu0 %v1100
        %1128 = vmatprep.subr.mxu0 0.0
        %1129 = vmatpush1.msra.mxu0 %v1101
        %1130 = vmatprep.subr.mxu0 0.0
        %1131 = vmatpush1.msra.mxu0 %v1102
        %1132 = vmatprep.subr.mxu0 0.0
        %1133 = vmatpush1.msra.mxu0 %v1103
        %1134 = vmatprep.subr.mxu0 0.0
        %1135 = vmatpush1.msra.mxu0 %v1104
        %1136 = vmatprep.subr.mxu0 0.0
        %1137 = vmatpush1.msra.mxu0 %v1105
        %1138 = vmatprep.subr.mxu0 0.0
        %1139 = vmatpush1.msra.mxu0 %v1106
        %1140 = vmatprep.subr.mxu0 0.0
        %1141 = vmatpush1.msra.mxu0 %v1107
        %1142 = vmatprep.subr.mxu0 0.0
        %1143 = vmatpush1.msra.mxu0 %v1108
        %1144 = vmatprep.subr.mxu0 0.0
        %1145 = vmatpush1.msra.mxu0 %v1109
        %1146 = vmatprep.subr.mxu0 0.0
        %1147 = vmatpush1.msra.mxu0 %v1110
        %1148 = vmatprep.subr.mxu0 0.0
        %1149 = vmatpush1.msra.mxu0 %v1111
        %1150 = vmatprep.subr.mxu0 0.0
        %1151 = vmatpush1.msra.mxu0 %v1112
        %1152 = vmatprep.subr.mxu0 0.0
        %1153 = vmatpush1.msra.mxu0 0.0
        %1154 = vmatprep.subr.mxu0 0.0
        %1155 = vmatpush1.msra.mxu0 0.0
        %1156 = vmatprep.subr.mxu0 0.0
        %1157 = vmatpush1.msra.mxu0 0.0
        %1158 = vmatprep.subr.mxu0 0.0
        %1159 = vmatpush1.msra.mxu0 0.0
        %1160 = vmatprep.subr.mxu0 0.0
        %1161 = vmatpush1.msra.mxu0 0.0
        %1162 = vmatprep.subr.mxu0 0.0
        %1163 = vmatpush1.msra.mxu0 0.0
        %1164 = vmatprep.subr.mxu0 0.0
        %1165 = vmatpush1.msra.mxu0 0.0
        %1166 = vmatprep.subr.mxu0 0.0
        %1167 = vmatpush1.msra.mxu0 0.0
        %1168 = vmatprep.subr.mxu0 0.0
        %1169 = vmatpush1.msra.mxu0 0.0
        %1170 = vmatprep.subr.mxu0 0.0
        %1171 = vmatpush1.msra.mxu0 0.0
        %1172 = vmatprep.subr.mxu0 0.0
        %1173 = vmatpush1.msra.mxu0 0.0
        %1174 = vmatprep.subr.mxu0 0.0
        %1175 = vmatpush1.msra.mxu0 0.0
        %1176 = vmatprep.subr.mxu0 0.0
        %1177 = vmatpush1.msra.mxu0 0.0
        %1178 = vmatprep.subr.mxu0 0.0
        %1179 = vmatpush1.msra.mxu0 0.0
        %1180 = vmatprep.subr.mxu0 0.0
        %1181 = vmatpush1.msra.mxu0 0.0
        %1182 = vmatprep.subr.mxu0 0.0
        %1183 = vmatpush1.msra.mxu0 0.0
        %1184 = vmatprep.mubr.f32.mxu0 0.0
        %1185 = vmatmul.mubr.f32.gmra.mrb[0].mxu0 %v1095
        %v1186 = vpop.f32.mrb[0].mxu0
        %v1187 = vadd.f32 %v1118, %v1186
        %v1188 = vpop.f32.mrb[0].mxu0
        %1189 = vmatprep.mubr.f32.mxu0 0.0
        %1190 = vmatmul.mubr.f32.gmra.mrb[0].mxu0 %v1096
        %v1191 = vpop.f32.mrb[0].mxu0
        %v1192 = vadd.f32 %v1118, %v1191
        %v1193 = vpop.f32.mrb[0].mxu0
        %1194 = vdwg.mxu0
        %v1195 = vmax.f32 %v1187, 0.0
        %v1196 = vmax.f32 %v1192, 0.0
        %v1197 = vld [vmem:[%s5] sm:$0xff]
        %v1198 = vld [vmem:[%s5 + $0x8] sm:$0xff]
        %v1199 = vld [vmem:[%s5 + $0x10] sm:$0xff]
        %v1200 = vld [vmem:[%s5 + $0x18] sm:$0xff]
        %v1201 = vld [vmem:[%s5 + $0x20] sm:$0xff]
        %v1202 = vld [vmem:[%s5 + $0x28] sm:$0xff]
        %v1203 = vld [vmem:[%s5 + $0x30] sm:$0xff]
        %v1204 = vld [vmem:[%s5 + $0x38] sm:$0xff]
        %v1205 = vld [vmem:[%s5 + $0x40] sm:$0xff]
        %v1206 = vld [vmem:[%s5 + $0x48] sm:$0xff]
        %v1207 = vld [vmem:[%s5 + $0x50] sm:$0xff]
        %v1208 = vld [vmem:[%s5 + $0x58] sm:$0xff]
        %v1209 = vld [vmem:[%s5 + $0x60] sm:$0xff]
        %v1210 = vld [vmem:[%s5 + $0x68] sm:$0xff]
        %v1211 = vld [vmem:[%s5 + $0x70] sm:$0xff]
        %v1212 = vld [vmem:[%s5 + $0x78] sm:$0xff]
        %1213 = vmatprep.subr.mxu0 0.0
        %1214 = vmatpush1.msra.mxu0 %v1197
        %1215 = vmatprep.subr.mxu0 0.0
        %1216 = vmatpush1.msra.mxu0 %v1198
        %1217 = vmatprep.subr.mxu0 0.0
        %1218 = vmatpush1.msra.mxu0 %v1199
        %1219 = vmatprep.subr.mxu0 0.0
        %1220 = vmatpush1.msra.mxu0 %v1200
        %1221 = vmatprep.subr.mxu0 0.0
        %1222 = vmatpush1.msra.mxu0 %v1201
        %1223 = vmatprep.subr.mxu0 0.0
        %1224 = vmatpush1.msra.mxu0 %v1202
        %1225 = vmatprep.subr.mxu0 0.0
        %1226 = vmatpush1.msra.mxu0 %v1203
        %1227 = vmatprep.subr.mxu0 0.0
        %1228 = vmatpush1.msra.mxu0 %v1204
        %1229 = vmatprep.subr.mxu0 0.0
        %1230 = vmatpush1.msra.mxu0 %v1205
        %1231 = vmatprep.subr.mxu0 0.0
        %1232 = vmatpush1.msra.mxu0 %v1206
        %1233 = vmatprep.subr.mxu0 0.0
        %1234 = vmatpush1.msra.mxu0 %v1207
        %1235 = vmatprep.subr.mxu0 0.0
        %1236 = vmatpush1.msra.mxu0 %v1208
        %1237 = vmatprep.subr.mxu0 0.0
        %1238 = vmatpush1.msra.mxu0 %v1209
        %1239 = vmatprep.subr.mxu0 0.0
        %1240 = vmatpush1.msra.mxu0 %v1210
        %1241 = vmatprep.subr.mxu0 0.0
        %1242 = vmatpush1.msra.mxu0 %v1211
        %1243 = vmatprep.subr.mxu0 0.0
        %1244 = vmatpush1.msra.mxu0 %v1212
        %1245 = vmatprep.subr.mxu0 0.0
        %1246 = vmatpush1.msra.mxu0 0.0
        %1247 = vmatprep.subr.mxu0 0.0
        %1248 = vmatpush1.msra.mxu0 0.0
        %1249 = vmatprep.subr.mxu0 0.0
        %1250 = vmatpush1.msra.mxu0 0.0
        %1251 = vmatprep.subr.mxu0 0.0
        %1252 = vmatpush1.msra.mxu0 0.0
        %1253 = vmatprep.subr.mxu0 0.0
        %1254 = vmatpush1.msra.mxu0 0.0
        %1255 = vmatprep.subr.mxu0 0.0
        %1256 = vmatpush1.msra.mxu0 0.0
        %1257 = vmatprep.subr.mxu0 0.0
        %1258 = vmatpush1.msra.mxu0 0.0
        %1259 = vmatprep.subr.mxu0 0.0
        %1260 = vmatpush1.msra.mxu0 0.0
        %1261 = vmatprep.subr.mxu0 0.0
        %1262 = vmatpush1.msra.mxu0 0.0
        %1263 = vmatprep.subr.mxu0 0.0
        %1264 = vmatpush1.msra.mxu0 0.0
        %1265 = vmatprep.subr.mxu0 0.0
        %1266 = vmatpush1.msra.mxu0 0.0
        %1267 = vmatprep.subr.mxu0 0.0
        %1268 = vmatpush1.msra.mxu0 0.0
        %1269 = vmatprep.subr.mxu0 0.0
        %1270 = vmatpush1.msra.mxu0 0.0
        %1271 = vmatprep.subr.mxu0 0.0
        %1272 = vmatpush1.msra.mxu0 0.0
        %1273 = vmatprep.subr.mxu0 0.0
        %1274 = vmatpush1.msra.mxu0 0.0
        %1275 = vmatprep.subr.mxu0 0.0
        %1276 = vmatpush1.msra.mxu0 0.0
        %1277 = vmatprep.mubr.f32.mxu0 0.0
        %1278 = vmatmul.mubr.f32.gmra.mrb[0].mxu0 %v1195
        %v1279 = vpop.f32.mrb[0].mxu0
        %v1280 = vadd.f32 0.0, %v1279
        %v1281 = vpop.f32.mrb[0].mxu0
        %1282 = vmatprep.mubr.f32.mxu0 0.0
        %1283 = vmatmul.mubr.f32.gmra.mrb[0].mxu0 %v1196
        %v1284 = vpop.f32.mrb[0].mxu0
        %v1285 = vadd.f32 0.0, %v1284
        %v1286 = vpop.f32.mrb[0].mxu0
        %1287 = vdwg.mxu0
        %v1288 = vmax.f32 %v1280, 0.0
        %v1289 = vmax.f32 %v1285, 0.0
        %v1290 = vld [vmem:[%s6] sm:$0xff]
        %v1291 = vld [vmem:[%s6 + $0x8] sm:$0xff]
        %v1292 = vld [vmem:[%s6 + $0x10] sm:$0xff]
        %v1293 = vld [vmem:[%s6 + $0x18] sm:$0xff]
        %v1294 = vld [vmem:[%s6 + $0x20] sm:$0xff]
        %v1295 = vld [vmem:[%s6 + $0x28] sm:$0xff]
        %v1296 = vld [vmem:[%s6 + $0x30] sm:$0xff]
        %v1297 = vld [vmem:[%s6 + $0x38] sm:$0xff]
        %v1298 = vld [vmem:[%s6 + $0x40] sm:$0xff]
        %v1299 = vld [vmem:[%s6 + $0x48] sm:$0xff]
        %v1300 = vld [vmem:[%s6 + $0x50] sm:$0xff]
        %v1301 = vld [vmem:[%s6 + $0x58] sm:$0xff]
        %v1302 = vld [vmem:[%s6 + $0x60] sm:$0xff]
        %v1303 = vld [vmem:[%s6 + $0x68] sm:$0xff]
        %v1304 = vld [vmem:[%s6 + $0x70] sm:$0xff]
        %v1305 = vld [vmem:[%s6 + $0x78] sm:$0xff]
        %1306 = vmatprep.subr.mxu0 0.0
        %1307 = vmatpush1.msra.mxu0 %v1290
        %1308 = vmatprep.subr.mxu0 0.0
        %1309 = vmatpush1.msra.mxu0 %v1291
        %1310 = vmatprep.subr.mxu0 0.0
        %1311 = vmatpush1.msra.mxu0 %v1292
        %1312 = vmatprep.subr.mxu0 0.0
        %1313 = vmatpush1.msra.mxu0 %v1293
        %1314 = vmatprep.subr.mxu0 0.0
        %1315 = vmatpush1.msra.mxu0 %v1294
        %1316 = vmatprep.subr.mxu0 0.0
        %1317 = vmatpush1.msra.mxu0 %v1295
        %1318 = vmatprep.subr.mxu0 0.0
        %1319 = vmatpush1.msra.mxu0 %v1296
        %1320 = vmatprep.subr.mxu0 0.0
        %1321 = vmatpush1.msra.mxu0 %v1297
        %1322 = vmatprep.subr.mxu0 0.0
        %1323 = vmatpush1.msra.mxu0 %v1298
        %1324 = vmatprep.subr.mxu0 0.0
        %1325 = vmatpush1.msra.mxu0 %v1299
        %1326 = vmatprep.subr.mxu0 0.0
        %1327 = vmatpush1.msra.mxu0 %v1300
        %1328 = vmatprep.subr.mxu0 0.0
        %1329 = vmatpush1.msra.mxu0 %v1301
        %1330 = vmatprep.subr.mxu0 0.0
        %1331 = vmatpush1.msra.mxu0 %v1302
        %1332 = vmatprep.subr.mxu0 0.0
        %1333 = vmatpush1.msra.mxu0 %v1303
        %1334 = vmatprep.subr.mxu0 0.0
        %1335 = vmatpush1.msra.mxu0 %v1304
        %1336 = vmatprep.subr.mxu0 0.0
        %1337 = vmatpush1.msra.mxu0 %v1305
        %1338 = vmatprep.subr.mxu0 0.0
        %1339 = vmatpush1.msra.mxu0 0.0
        %1340 = vmatprep.subr.mxu0 0.0
        %1341 = vmatpush1.msra.mxu0 0.0
        %1342 = vmatprep.subr.mxu0 0.0
        %1343 = vmatpush1.msra.mxu0 0.0
        %1344 = vmatprep.subr.mxu0 0.0
        %1345 = vmatpush1.msra.mxu0 0.0
        %1346 = vmatprep.subr.mxu0 0.0
        %1347 = vmatpush1.msra.mxu0 0.0
        %1348 = vmatprep.subr.mxu0 0.0
        %1349 = vmatpush1.msra.mxu0 0.0
        %1350 = vmatprep.subr.mxu0 0.0
        %1351 = vmatpush1.msra.mxu0 0.0
        %1352 = vmatprep.subr.mxu0 0.0
        %1353 = vmatpush1.msra.mxu0 0.0
        %1354 = vmatprep.subr.mxu0 0.0
        %1355 = vmatpush1.msra.mxu0 0.0
        %1356 = vmatprep.subr.mxu0 0.0
        %1357 = vmatpush1.msra.mxu0 0.0
        %1358 = vmatprep.subr.mxu0 0.0
        %1359 = vmatpush1.msra.mxu0 0.0
        %1360 = vmatprep.subr.mxu0 0.0
        %1361 = vmatpush1.msra.mxu0 0.0
        %1362 = vmatprep.subr.mxu0 0.0
        %1363 = vmatpush1.msra.mxu0 0.0
        %1364 = vmatprep.subr.mxu0 0.0
        %1365 = vmatpush1.msra.mxu0 0.0
        %1366 = vmatprep.subr.mxu0 0.0
        %1367 = vmatpush1.msra.mxu0 0.0
        %1368 = vmatprep.subr.mxu0 0.0
        %1369 = vmatpush1.msra.mxu0 0.0
        %1370 = vmatprep.mubr.f32.mxu0 0.0
        %1371 = vmatmul.mubr.f32.gmra.mrb[0].mxu0 %v1288
        %v1372 = vpop.f32.mrb[0].mxu0
        %v1373 = vadd.f32 0.0, %v1372
        %v1374 = vpop.f32.mrb[0].mxu0
        %1375 = vmatprep.mubr.f32.mxu0 0.0
        %1376 = vmatmul.mubr.f32.gmra.mrb[0].mxu0 %v1289
        %v1377 = vpop.f32.mrb[0].mxu0
        %v1378 = vadd.f32 0.0, %v1377
        %v1379 = vpop.f32.mrb[0].mxu0
        %1380 = vdwg.mxu0
        %1381 = vmatprep.subr.mxu0 0.0
        %1382 = vmatpush1.msra.mxu0 %v1373
        %1383 = vmatprep.subr.mxu0 0.0
        %1384 = vmatpush1.msra.mxu0 %v1378
        %1385 = vmatprep.subr.mxu0 0.0
        %1386 = vmatpush1.msra.mxu0 0.0
        %1387 = vmatprep.subr.mxu0 0.0
        %1388 = vmatpush1.msra.mxu0 0.0
        %1389 = vmatprep.subr.mxu0 0.0
        %1390 = vmatpush1.msra.mxu0 0.0
        %1391 = vmatprep.subr.mxu0 0.0
        %1392 = vmatpush1.msra.mxu0 0.0
        %1393 = vmatprep.subr.mxu0 0.0
        %1394 = vmatpush1.msra.mxu0 0.0
        %1395 = vmatprep.subr.mxu0 0.0
        %1396 = vmatpush1.msra.mxu0 0.0
        %1397 = vmatprep.subr.mxu0 0.0
        %1398 = vmatpush1.msra.mxu0 0.0
        %1399 = vmatprep.subr.mxu0 0.0
        %1400 = vmatpush1.msra.mxu0 0.0
        %1401 = vmatprep.subr.mxu0 0.0
        %1402 = vmatpush1.msra.mxu0 0.0
        %1403 = vmatprep.subr.mxu0 0.0
        %1404 = vmatpush1.msra.mxu0 0.0
        %1405 = vmatprep.subr.mxu0 0.0
        %1406 = vmatpush1.msra.mxu0 0.0
        %1407 = vmatprep.subr.mxu0 0.0
        %1408 = vmatpush1.msra.mxu0 0.0
        %1409 = vmatprep.subr.mxu0 0.0
        %1410 = vmatpush1.msra.mxu0 0.0
        %1411 = vmatprep.subr.mxu0 0.0
        %1412 = vmatpush1.msra.mxu0 0.0
        %1413 = vmatprep.subr.mxu0 0.0
        %1414 = vmatpush1.msra.mxu0 0.0
        %1415 = vmatprep.subr.mxu0 0.0
        %1416 = vmatpush1.msra.mxu0 0.0
        %1417 = vmatprep.subr.mxu0 0.0
        %1418 = vmatpush1.msra.mxu0 0.0
        %1419 = vmatprep.subr.mxu0 0.0
        %1420 = vmatpush1.msra.mxu0 0.0
        %1421 = vmatprep.subr.mxu0 0.0
        %1422 = vmatpush1.msra.mxu0 0.0
        %1423 = vmatprep.subr.mxu0 0.0
        %1424 = vmatpush1.msra.mxu0 0.0
        %1425 = vmatprep.subr.mxu0 0.0
        %1426 = vmatpush1.msra.mxu0 0.0
        %1427 = vmatprep.subr.mxu0 0.0
        %1428 = vmatpush1.msra.mxu0 0.0
        %1429 = vmatprep.subr.mxu0 0.0
        %1430 = vmatpush1.msra.mxu0 0.0
        %1431 = vmatprep.subr.mxu0 0.0
        %1432 = vmatpush1.msra.mxu0 0.0
        %1433 = vmatprep.subr.mxu0 0.0
        %1434 = vmatpush1.msra.mxu0 0.0
        %1435 = vmatprep.subr.mxu0 0.0
        %1436 = vmatpush1.msra.mxu0 0.0
        %1437 = vmatprep.subr.mxu0 0.0
        %1438 = vmatpush1.msra.mxu0 0.0
        %1439 = vmatprep.subr.mxu0 0.0
        %1440 = vmatpush1.msra.mxu0 0.0
        %1441 = vmatprep.subr.mxu0 0.0
        %1442 = vmatpush1.msra.mxu0 0.0
        %1443 = vmatprep.subr.mxu0 0.0
        %1444 = vmatpush1.msra.mxu0 0.0
        %1445 = vmatprep.mubr.f32.mxu0 0.0
        %1446 = vmatmul.mubr.f32.gmra.mrb[0].mxu0 %v680
        %v1447 = vpop.f32.mrb[0].mxu0
        %v1448 = vadd.f32 0.0, %v1447
        %v1449 = vpop.f32.mrb[0].mxu0
        %1450 = vmatprep.mubr.f32.mxu0 0.0
        %1451 = vmatmul.mubr.f32.gmra.mrb[0].mxu0 %v683
        %v1452 = vpop.f32.mrb[0].mxu0
        %v1453 = vadd.f32 0.0, %v1452
        %v1454 = vpop.f32.mrb[0].mxu0
        %1455 = vdwg.mxu0
        %v1456 = vsel %vm770, %v1448, %v1195
        %v1457 = vsel %vm771, %v1453, %v1196
        %s1458 = scalar_lea.vmem %s5, 128
        %v1459 = vld [vmem:[%s1458] sm:$0xff]
        %v1460 = vld [vmem:[%s1458 + $0x8] sm:$0xff]
        %v1461 = vld [vmem:[%s1458 + $0x10] sm:$0xff]
        %v1462 = vld [vmem:[%s1458 + $0x18] sm:$0xff]
        %v1463 = vld [vmem:[%s1458 + $0x20] sm:$0xff]
        %v1464 = vld [vmem:[%s1458 + $0x28] sm:$0xff]
        %v1465 = vld [vmem:[%s1458 + $0x30] sm:$0xff]
        %v1466 = vld [vmem:[%s1458 + $0x38] sm:$0xff]
        %v1467 = vld [vmem:[%s1458 + $0x40] sm:$0xff]
        %v1468 = vld [vmem:[%s1458 + $0x48] sm:$0xff]
        %v1469 = vld [vmem:[%s1458 + $0x50] sm:$0xff]
        %v1470 = vld [vmem:[%s1458 + $0x58] sm:$0xff]
        %v1471 = vld [vmem:[%s1458 + $0x60] sm:$0xff]
        %v1472 = vld [vmem:[%s1458 + $0x68] sm:$0xff]
        %v1473 = vld [vmem:[%s1458 + $0x70] sm:$0xff]
        %v1474 = vld [vmem:[%s1458 + $0x78] sm:$0xff]
        %1475 = vmatprep.subr.mxu0 0.0
        %1476 = vmatpush1.msra.mxu0 %v1459
        %1477 = vmatprep.subr.mxu0 0.0
        %1478 = vmatpush1.msra.mxu0 %v1460
        %1479 = vmatprep.subr.mxu0 0.0
        %1480 = vmatpush1.msra.mxu0 %v1461
        %1481 = vmatprep.subr.mxu0 0.0
        %1482 = vmatpush1.msra.mxu0 %v1462
        %1483 = vmatprep.subr.mxu0 0.0
        %1484 = vmatpush1.msra.mxu0 %v1463
        %1485 = vmatprep.subr.mxu0 0.0
        %1486 = vmatpush1.msra.mxu0 %v1464
        %1487 = vmatprep.subr.mxu0 0.0
        %1488 = vmatpush1.msra.mxu0 %v1465
        %1489 = vmatprep.subr.mxu0 0.0
        %1490 = vmatpush1.msra.mxu0 %v1466
        %1491 = vmatprep.subr.mxu0 0.0
        %1492 = vmatpush1.msra.mxu0 %v1467
        %1493 = vmatprep.subr.mxu0 0.0
        %1494 = vmatpush1.msra.mxu0 %v1468
        %1495 = vmatprep.subr.mxu0 0.0
        %1496 = vmatpush1.msra.mxu0 %v1469
        %1497 = vmatprep.subr.mxu0 0.0
        %1498 = vmatpush1.msra.mxu0 %v1470
        %1499 = vmatprep.subr.mxu0 0.0
        %1500 = vmatpush1.msra.mxu0 %v1471
        %1501 = vmatprep.subr.mxu0 0.0
        %1502 = vmatpush1.msra.mxu0 %v1472
        %1503 = vmatprep.subr.mxu0 0.0
        %1504 = vmatpush1.msra.mxu0 %v1473
        %1505 = vmatprep.subr.mxu0 0.0
        %1506 = vmatpush1.msra.mxu0 %v1474
        %1507 = vmatprep.subr.mxu0 0.0
        %1508 = vmatpush1.msra.mxu0 0.0
        %1509 = vmatprep.subr.mxu0 0.0
        %1510 = vmatpush1.msra.mxu0 0.0
        %1511 = vmatprep.subr.mxu0 0.0
        %1512 = vmatpush1.msra.mxu0 0.0
        %1513 = vmatprep.subr.mxu0 0.0
        %1514 = vmatpush1.msra.mxu0 0.0
        %1515 = vmatprep.subr.mxu0 0.0
        %1516 = vmatpush1.msra.mxu0 0.0
        %1517 = vmatprep.subr.mxu0 0.0
        %1518 = vmatpush1.msra.mxu0 0.0
        %1519 = vmatprep.subr.mxu0 0.0
        %1520 = vmatpush1.msra.mxu0 0.0
        %1521 = vmatprep.subr.mxu0 0.0
        %1522 = vmatpush1.msra.mxu0 0.0
        %1523 = vmatprep.subr.mxu0 0.0
        %1524 = vmatpush1.msra.mxu0 0.0
        %1525 = vmatprep.subr.mxu0 0.0
        %1526 = vmatpush1.msra.mxu0 0.0
        %1527 = vmatprep.subr.mxu0 0.0
        %1528 = vmatpush1.msra.mxu0 0.0
        %1529 = vmatprep.subr.mxu0 0.0
        %1530 = vmatpush1.msra.mxu0 0.0
        %1531 = vmatprep.subr.mxu0 0.0
        %1532 = vmatpush1.msra.mxu0 0.0
        %1533 = vmatprep.subr.mxu0 0.0
        %1534 = vmatpush1.msra.mxu0 0.0
        %1535 = vmatprep.subr.mxu0 0.0
        %1536 = vmatpush1.msra.mxu0 0.0
        %1537 = vmatprep.subr.mxu0 0.0
        %1538 = vmatpush1.msra.mxu0 0.0
        %1539 = vmatprep.mubr.f32.mxu0 0.0
        %1540 = vmatmul.mubr.f32.gmra.mrb[0].mxu0 %v1456
        %v1541 = vpop.f32.mrb[0].mxu0
        %v1542 = vadd.f32 0.0, %v1541
        %v1543 = vpop.f32.mrb[0].mxu0
        %1544 = vmatprep.mubr.f32.mxu0 0.0
        %1545 = vmatmul.mubr.f32.gmra.mrb[0].mxu0 %v1457
        %v1546 = vpop.f32.mrb[0].mxu0
        %v1547 = vadd.f32 0.0, %v1546
        %v1548 = vpop.f32.mrb[0].mxu0
        %1549 = vdwg.mxu0
        %v1550 = vmax.f32 %v1542, 0.0
        %v1551 = vmax.f32 %v1547, 0.0
        %s1552 = scalar_lea.vmem %s6, 128
        %v1553 = vld [vmem:[%s1552] sm:$0xff]
        %v1554 = vld [vmem:[%s1552 + $0x8] sm:$0xff]
        %v1555 = vld [vmem:[%s1552 + $0x10] sm:$0xff]
        %v1556 = vld [vmem:[%s1552 + $0x18] sm:$0xff]
        %v1557 = vld [vmem:[%s1552 + $0x20] sm:$0xff]
        %v1558 = vld [vmem:[%s1552 + $0x28] sm:$0xff]
        %v1559 = vld [vmem:[%s1552 + $0x30] sm:$0xff]
        %v1560 = vld [vmem:[%s1552 + $0x38] sm:$0xff]
        %v1561 = vld [vmem:[%s1552 + $0x40] sm:$0xff]
        %v1562 = vld [vmem:[%s1552 + $0x48] sm:$0xff]
        %v1563 = vld [vmem:[%s1552 + $0x50] sm:$0xff]
        %v1564 = vld [vmem:[%s1552 + $0x58] sm:$0xff]
        %v1565 = vld [vmem:[%s1552 + $0x60] sm:$0xff]
        %v1566 = vld [vmem:[%s1552 + $0x68] sm:$0xff]
        %v1567 = vld [vmem:[%s1552 + $0x70] sm:$0xff]
        %v1568 = vld [vmem:[%s1552 + $0x78] sm:$0xff]
        %1569 = vmatprep.subr.mxu0 0.0
        %1570 = vmatpush1.msra.mxu0 %v1553
        %1571 = vmatprep.subr.mxu0 0.0
        %1572 = vmatpush1.msra.mxu0 %v1554
        %1573 = vmatprep.subr.mxu0 0.0
        %1574 = vmatpush1.msra.mxu0 %v1555
        %1575 = vmatprep.subr.mxu0 0.0
        %1576 = vmatpush1.msra.mxu0 %v1556
        %1577 = vmatprep.subr.mxu0 0.0
        %1578 = vmatpush1.msra.mxu0 %v1557
        %1579 = vmatprep.subr.mxu0 0.0
        %1580 = vmatpush1.msra.mxu0 %v1558
        %1581 = vmatprep.subr.mxu0 0.0
        %1582 = vmatpush1.msra.mxu0 %v1559
        %1583 = vmatprep.subr.mxu0 0.0
        %1584 = vmatpush1.msra.mxu0 %v1560
        %1585 = vmatprep.subr.mxu0 0.0
        %1586 = vmatpush1.msra.mxu0 %v1561
        %1587 = vmatprep.subr.mxu0 0.0
        %1588 = vmatpush1.msra.mxu0 %v1562
        %1589 = vmatprep.subr.mxu0 0.0
        %1590 = vmatpush1.msra.mxu0 %v1563
        %1591 = vmatprep.subr.mxu0 0.0
        %1592 = vmatpush1.msra.mxu0 %v1564
        %1593 = vmatprep.subr.mxu0 0.0
        %1594 = vmatpush1.msra.mxu0 %v1565
        %1595 = vmatprep.subr.mxu0 0.0
        %1596 = vmatpush1.msra.mxu0 %v1566
        %1597 = vmatprep.subr.mxu0 0.0
        %1598 = vmatpush1.msra.mxu0 %v1567
        %1599 = vmatprep.subr.mxu0 0.0
        %1600 = vmatpush1.msra.mxu0 %v1568
        %1601 = vmatprep.subr.mxu0 0.0
        %1602 = vmatpush1.msra.mxu0 0.0
        %1603 = vmatprep.subr.mxu0 0.0
        %1604 = vmatpush1.msra.mxu0 0.0
        %1605 = vmatprep.subr.mxu0 0.0
        %1606 = vmatpush1.msra.mxu0 0.0
        %1607 = vmatprep.subr.mxu0 0.0
        %1608 = vmatpush1.msra.mxu0 0.0
        %1609 = vmatprep.subr.mxu0 0.0
        %1610 = vmatpush1.msra.mxu0 0.0
        %1611 = vmatprep.subr.mxu0 0.0
        %1612 = vmatpush1.msra.mxu0 0.0
        %1613 = vmatprep.subr.mxu0 0.0
        %1614 = vmatpush1.msra.mxu0 0.0
        %1615 = vmatprep.subr.mxu0 0.0
        %1616 = vmatpush1.msra.mxu0 0.0
        %1617 = vmatprep.subr.mxu0 0.0
        %1618 = vmatpush1.msra.mxu0 0.0
        %1619 = vmatprep.subr.mxu0 0.0
        %1620 = vmatpush1.msra.mxu0 0.0
        %1621 = vmatprep.subr.mxu0 0.0
        %1622 = vmatpush1.msra.mxu0 0.0
        %1623 = vmatprep.subr.mxu0 0.0
        %1624 = vmatpush1.msra.mxu0 0.0
        %1625 = vmatprep.subr.mxu0 0.0
        %1626 = vmatpush1.msra.mxu0 0.0
        %1627 = vmatprep.subr.mxu0 0.0
        %1628 = vmatpush1.msra.mxu0 0.0
        %1629 = vmatprep.subr.mxu0 0.0
        %1630 = vmatpush1.msra.mxu0 0.0
        %1631 = vmatprep.subr.mxu0 0.0
        %1632 = vmatpush1.msra.mxu0 0.0
        %1633 = vmatprep.mubr.f32.mxu0 0.0
        %1634 = vmatmul.mubr.f32.gmra.mrb[0].mxu0 %v1550
        %v1635 = vpop.f32.mrb[0].mxu0
        %v1636 = vadd.f32 0.0, %v1635
        %v1637 = vpop.f32.mrb[0].mxu0
        %1638 = vmatprep.mubr.f32.mxu0 0.0
        %1639 = vmatmul.mubr.f32.gmra.mrb[0].mxu0 %v1551
        %v1640 = vpop.f32.mrb[0].mxu0
        %v1641 = vadd.f32 0.0, %v1640
        %v1642 = vpop.f32.mrb[0].mxu0
        %1643 = vdwg.mxu0
        %1644 = vmatprep.subr.mxu0 0.0
        %1645 = vmatpush1.msra.mxu0 %v1636
        %1646 = vmatprep.subr.mxu0 0.0
        %1647 = vmatpush1.msra.mxu0 %v1641
        %1648 = vmatprep.subr.mxu0 0.0
        %1649 = vmatpush1.msra.mxu0 0.0
        %1650 = vmatprep.subr.mxu0 0.0
        %1651 = vmatpush1.msra.mxu0 0.0
        %1652 = vmatprep.subr.mxu0 0.0
        %1653 = vmatpush1.msra.mxu0 0.0
        %1654 = vmatprep.subr.mxu0 0.0
        %1655 = vmatpush1.msra.mxu0 0.0
        %1656 = vmatprep.subr.mxu0 0.0
        %1657 = vmatpush1.msra.mxu0 0.0
        %1658 = vmatprep.subr.mxu0 0.0
        %1659 = vmatpush1.msra.mxu0 0.0
        %1660 = vmatprep.subr.mxu0 0.0
        %1661 = vmatpush1.msra.mxu0 0.0
        %1662 = vmatprep.subr.mxu0 0.0
        %1663 = vmatpush1.msra.mxu0 0.0
        %1664 = vmatprep.subr.mxu0 0.0
        %1665 = vmatpush1.msra.mxu0 0.0
        %1666 = vmatprep.subr.mxu0 0.0
        %1667 = vmatpush1.msra.mxu0 0.0
        %1668 = vmatprep.subr.mxu0 0.0
        %1669 = vmatpush1.msra.mxu0 0.0
        %1670 = vmatprep.subr.mxu0 0.0
        %1671 = vmatpush1.msra.mxu0 0.0
        %1672 = vmatprep.subr.mxu0 0.0
        %1673 = vmatpush1.msra.mxu0 0.0
        %1674 = vmatprep.subr.mxu0 0.0
        %1675 = vmatpush1.msra.mxu0 0.0
        %1676 = vmatprep.subr.mxu0 0.0
        %1677 = vmatpush1.msra.mxu0 0.0
        %1678 = vmatprep.subr.mxu0 0.0
        %1679 = vmatpush1.msra.mxu0 0.0
        %1680 = vmatprep.subr.mxu0 0.0
        %1681 = vmatpush1.msra.mxu0 0.0
        %1682 = vmatprep.subr.mxu0 0.0
        %1683 = vmatpush1.msra.mxu0 0.0
        %1684 = vmatprep.subr.mxu0 0.0
        %1685 = vmatpush1.msra.mxu0 0.0
        %1686 = vmatprep.subr.mxu0 0.0
        %1687 = vmatpush1.msra.mxu0 0.0
        %1688 = vmatprep.subr.mxu0 0.0
        %1689 = vmatpush1.msra.mxu0 0.0
        %1690 = vmatprep.subr.mxu0 0.0
        %1691 = vmatpush1.msra.mxu0 0.0
        %1692 = vmatprep.subr.mxu0 0.0
        %1693 = vmatpush1.msra.mxu0 0.0
        %1694 = vmatprep.subr.mxu0 0.0
        %1695 = vmatpush1.msra.mxu0 0.0
        %1696 = vmatprep.subr.mxu0 0.0
        %1697 = vmatpush1.msra.mxu0 0.0
        %1698 = vmatprep.subr.mxu0 0.0
        %1699 = vmatpush1.msra.mxu0 0.0
        %1700 = vmatprep.subr.mxu0 0.0
        %1701 = vmatpush1.msra.mxu0 0.0
        %1702 = vmatprep.subr.mxu0 0.0
        %1703 = vmatpush1.msra.mxu0 0.0
        %1704 = vmatprep.subr.mxu0 0.0
        %1705 = vmatpush1.msra.mxu0 0.0
        %1706 = vmatprep.subr.mxu0 0.0
        %1707 = vmatpush1.msra.mxu0 0.0
        %1708 = vmatprep.mubr.f32.mxu0 0.0
        %1709 = vmatmul.mubr.f32.gmra.mrb[0].mxu0 %v961
        %v1710 = vpop.f32.mrb[0].mxu0
        %v1711 = vadd.f32 0.0, %v1710
        %v1712 = vpop.f32.mrb[0].mxu0
        %1713 = vmatprep.mubr.f32.mxu0 0.0
        %1714 = vmatmul.mubr.f32.gmra.mrb[0].mxu0 %v964
        %v1715 = vpop.f32.mrb[0].mxu0
        %v1716 = vadd.f32 0.0, %v1715
        %v1717 = vpop.f32.mrb[0].mxu0
        %1718 = vdwg.mxu0
        %v1719 = vsel %vm1051, %v1711, %v1456
        %v1720 = vsel %vm1052, %v1716, %v1457
        %v1721 = vld [vmem:[%s11] sm:$0x1]
        %v1722 = vld [vmem:[%s12] sm:$0x1]
        %1723 = vadd.xlane.f32.xlu0 %v1719
        %v1724 = vpop.xlane.xlu0 %1723
        %1725 = vadd.xlane.f32.xlu0 %v1720
        %v1726 = vpop.xlane.xlu0 %1725
        %v1727 = vmul.f32 %v1724, 0.03125
        %v1728 = vmul.f32 %v1726, 0.03125
        %v1729 = vsub.f32 %v1719, %v1727
        %v1730 = vsub.f32 %v1720, %v1728
        %v1731 = vmul.f32 %v1729, %v483
        %v1732 = vmul.f32 %v1730, %v483
        %v1733 = vmul.f32 %v1731, %v1731
        %v1734 = vmul.f32 %v1732, %v1732
        %1735 = vadd.xlane.f32.xlu0 %v1733
        %v1736 = vpop.xlane.xlu0 %1735
        %1737 = vadd.xlane.f32.xlu0 %v1734
        %v1738 = vpop.xlane.xlu0 %1737
        %v1739 = vmul.f32 %v1736, 0.03125
        %v1740 = vmul.f32 %v1738, 0.03125
        %v1741 = vadd.f32 %v1739, 1e-05
        %v1742 = vadd.f32 %v1740, 1e-05
        %v1743 = vrsqrt.pop %v1741
        %v1744 = vrsqrt.pop %v1742
        %v1745 = vmul.f32 %v1731, %v1743
        %v1746 = vmul.f32 %v1732, %v1744
        %v1748 = vlaneseq
        %v1749 = vshrl.u32 %v1748, 7
        %v1750 = vsub.s32 0, %v1749
        %v1751 = vrot.slane %v1721, %v1750
        %v1753 = vmul.f32 %v1745, %v1751
        %v1754 = vmul.f32 %v1746, %v1751
        %v1756 = vlaneseq
        %v1757 = vshrl.u32 %v1756, 7
        %v1758 = vsub.s32 0, %v1757
        %v1759 = vrot.slane %v1722, %v1758
        %v1761 = vadd.f32 %v1753, %v1759
        %v1762 = vadd.f32 %v1754, %v1759
        %1763 = vst [vmem:[%s463] sm:$0xff] %v1761
        %1764 = vst [vmem:[%s463 + $0x8] sm:$0xff] %v1762
        %s1765 = sand.u32 %s323, 1
        %s1766 = scalar_lea.sflag [#allocation3], %s1765
        %s1767 = sand.u32 %s323, 1
        %s1768 = smul.addr %s1767, 16
        %s1769 = scalar_lea.vmem [#allocation2], %s1768
        // Predicated region
        $region73: #{gnn_encoder_forward.1} parent=71 // pred_check
          %p1770 = pneg %p333
        $region74: #{gnn_encoder_forward.1} parent=71 // pred_check_branch
          %1772 = sbr.rel (%p1770) target = $region76
        $region75: #{gnn_encoder_forward.1} parent=71 // pred_region
          %s1774 = ssub.s32 256, 256
          %1775 = vsyncadd %s1766, %s1774
          %s1776 = smul.addr %s27, 2
          %s1777 = smul.addr %s1776, 128
          %s1778 = scalar_lea.hbm %s13, %s1777
          %s1779 = sshll.u32 %s1769, 4
          %s1780 = int_to_ptr.vmem [resolvable:$true] %s1779
          %1785 = dma.vmem_to_hbm [thread:$0]  %s1780, 256, %s1778, %s1766, 128, 128, 8
        $region76: #{gnn_encoder_forward.1} parent=71 // pred_fallthru
          _
      $region72: #{gnn_encoder_forward.1} parent=5 // pred_fallthru
        _
      %p1786 = scmp.le.s32.totalorder 2, %s22
      // Predicated region
      $region77: #{gnn_encoder_forward.1} parent=5 // pred_check
        %p1787 = pneg %p1786
      $region78: #{gnn_encoder_forward.1} parent=5 // pred_check_branch
        %1789 = sbr.rel (%p1787) target = $region80
      $region79: #{gnn_encoder_forward.1} parent=5 // pred_region
        %s1790 = ssub.s32 %s22, 2
        // Predicated region
        $region81: #{gnn_encoder_forward.1} parent=79 // pred_check
          %p1791 = pneg %p339
        $region82: #{gnn_encoder_forward.1} parent=79 // pred_check_branch
          %1793 = sbr.rel (%p1791) target = $region84
        $region83: #{gnn_encoder_forward.1} parent=79 // pred_region
          %s1794 = sand.u32 %s324, 1
          %s1795 = scalar_lea.sflag [#allocation3], %s1794
          %s1796 = sand.u32 %s324, 1
          %s1797 = smul.addr %s1796, 16
          %s1798 = scalar_lea.vmem [#allocation2], %s1797
          %1799 = dma.done %s1795, 256
        $region84: #{gnn_encoder_forward.1} parent=79 // pred_fallthru
          _
      $region80: #{gnn_encoder_forward.1} parent=5 // pred_fallthru
        _
    $region6: #{gnn_encoder_forward.1} parent=1 // loop_footer
      %s26 = sadd.s32 1, %s22
    $region7: #{gnn_encoder_forward.1} parent=1 // loop_footer_branch
      %21 = sbr.rel target = $region3
    $region8: #{gnn_encoder_forward.1} parent=1 // loop_exit
      _
    %1800 = vsyncpa [#allocation3], 1
    %s1801 = scalar_lea.sflag [#allocation3], 1
    %1802 = vsyncpa %s1801, 1

</llo_original>
